<compile_context>
chip_gen: v6e
topology: v6e:2x2x1
jax: 0.10.0
libtpu: 0.0.40
codegen_flags: <defaults>
</compile_context>

<pallas_src>
import functools
import numpy as np
import jax
import jax.numpy as jnp
from jax.experimental import pallas as pl
from jax.experimental.pallas import tpu as pltpu


def _round_up(x, m):
    return (x + m - 1) // m * m


def _biattention_kernel(v_ref, q_ref, wv_ref, bv_ref, wq_ref, bq_ref,
                        ht_ref, hbias_ref, p_ref, logits_ref,
                        *, mm_dtype, fold_dtype):
    bt, vn, vdim = v_ref.shape
    _, qn, qdim = q_ref.shape
    hkp, glimpse = ht_ref.shape
    qp = p_ref.shape[-1]                      # q_num padded to a multiple of 128
    neg_inf = jnp.float32(-jnp.inf)

    # ---- batched FCNet projections: one MXU matmul each for all bt elements ----
    v_flat = v_ref[...].reshape(bt * vn, vdim)     # f32 (raw v also feeds the mask)
    q_flat = q_ref[...].reshape(bt * qn, qdim)
    v_ = jnp.maximum(
        jnp.dot(v_flat.astype(mm_dtype), wv_ref[...],
                preferred_element_type=jnp.float32) + bv_ref[...], 0.0)  # (bt*vn, hkp)
    q_ = jnp.maximum(
        jnp.dot(q_flat.astype(mm_dtype), wq_ref[...],
                preferred_element_type=jnp.float32) + bq_ref[...], 0.0)  # (bt*qn, hkp)

    v_mm = v_.astype(mm_dtype)                     # MXU LHS operands, cast once
    # Single transpose per grid step.  In the bf16_fold path (v6e/v7x) the cast
    # happens BEFORE the transpose (halves XLU transpose bytes) and the h-fold
    # multiplies run on the bf16 VALU; on v5e fold_dtype stays f32.
    q_t = q_.astype(fold_dtype).T                  # (hkp, bt*qn)
    h_t = ht_ref[...].astype(fold_dtype)           # (hkp, glimpse)

    # Hoisted per-step broadcasts (JAX does not CSE broadcast_in_dim): one lane
    # splat of h per glimpse and the zero block for the qn -> qp lane pad.
    h_cols = [jnp.broadcast_to(h_t[:, g:g + 1], (hkp, qp)) for g in range(glimpse)]
    zpad = jnp.zeros((hkp, qp - qn), fold_dtype) if qp > qn else None
    # h_bias broadcast over lanes with -inf baked into the pad lanes: adding it
    # applies the bias and -inf-masks the padding in a single VPU add.
    hbias_row = hbias_ref[...]                     # (1, glimpse*qp) f32

    # v-mask: rows of v whose abs-sum is zero get -inf logits.
    vmask = jnp.sum(jnp.abs(v_flat), axis=-1, keepdims=True) == 0.0      # (bt*vn, 1)

    for b in range(bt):                            # static, small
        v_b = v_mm[b * vn:(b + 1) * vn, :]         # (vn, hkp)
        q_b = q_t[:, b * qn:(b + 1) * qn]          # (hkp, qn)
        if zpad is not None:
            q_b = jnp.concatenate([q_b, zpad], axis=-1)          # (hkp, qp)
        # Fold h into q and merge ALL glimpses onto the matmul N axis:
        #   qg_all[:, g*qp:(g+1)*qp] = q_b * h[:, g]   ->   N = glimpse*qp >= 512.
        qg_all = jnp.concatenate(
            [q_b * h_cols[g] for g in range(glimpse)], axis=-1).astype(mm_dtype)
        res = jnp.dot(v_b, qg_all, preferred_element_type=jnp.float32)   # (vn, g*qp)
        res = res + hbias_row                                            # bias + pad -inf
        res = jnp.where(vmask[b * vn:(b + 1) * vn, :], neg_inf, res)     # v-mask, once
        for g in range(glimpse):
            lg = res[:, g * qp:(g + 1) * qp]       # 128-aligned lane slice (vn, qp)
            logits_ref[b, g, :, :] = lg            # direct store, no intermediate copy
            # Softmax over the whole (v_num*q_num) slice of this (b, g); pad lanes
            # are -inf so they contribute exp(-inf)=0.  Fully-masked slices give
            # NaN, matching torch's softmax of all -inf.
            m = jnp.max(lg, axis=(0, 1), keepdims=True)
            e = jnp.exp(lg - m)
            s = jnp.sum(e, axis=(0, 1), keepdims=True)
            p_ref[b, g, :, :] = e * pl.reciprocal(s, approx=True)        # EUP divide


def bi_attention(v, q, wv_t, bv, wq_t, bq, h_mat, h_bias, *,
                 block_b=None, use_bf16=False, bf16_fold=None):
    """v: [B, v_num, v_dim], q: [B, q_num, q_dim].
    Returns (p, logits), each [B, glimpse, v_num, q_num] float32.

    use_bf16:  bf16 MXU operands (f32 accumulation) — fast matmul path on all gens.
    bf16_fold: cast q_ to bf16 before its transpose and fold h in bf16 (v6e/v7x,
               which have a bf16 VALU).  Set False on v5e.  Defaults to use_bf16.
    """
    B, v_num, v_dim = v.shape
    _, q_num, q_dim = q.shape
    glimpse, hk = h_mat.shape

    if block_b is None:
        # Leave >= 2 grid steps so the "parallel" batch axis shards across both
        # v7x TensorCores; on v6e/v5e prefer block_b*v_num >= 256 / >= 128 for
        # MXU row fill (pass block_b explicitly there if B allows).
        target = min(8, max(1, B // 2))
        block_b = next(d for d in range(target, 0, -1) if B % d == 0)
    assert B % block_b == 0, "batch must be divisible by block_b"

    if bf16_fold is None:
        bf16_fold = use_bf16
    mm_dtype = jnp.bfloat16 if use_bf16 else jnp.float32
    fold_dtype = jnp.bfloat16 if (use_bf16 and bf16_fold) else jnp.float32

    # Lane-dense padding of the feature (hk) axis — pure wrapper-side plumbing.
    hk_p = _round_up(hk, 128)
    q_p = _round_up(q_num, 128)
    if hk_p != hk:
        pad = hk_p - hk
        wv_t = jnp.pad(wv_t, ((0, 0), (0, pad)))
        wq_t = jnp.pad(wq_t, ((0, 0), (0, pad)))
        bv = jnp.pad(bv, ((0, 0), (0, pad)))
        bq = jnp.pad(bq, ((0, 0), (0, pad)))
        h_mat = jnp.pad(h_mat, ((0, 0), (0, pad)))

    wv_t = wv_t.astype(mm_dtype)             # MXU operands (halves weight VMEM in bf16)
    wq_t = wq_t.astype(mm_dtype)
    bv = bv.astype(jnp.float32)
    bq = bq.astype(jnp.float32)
    h_t = jnp.transpose(h_mat).astype(jnp.float32)        # (hk_p, glimpse)

    # h_bias replicated over the padded lane axis, with -inf in the pad lanes so
    # it doubles as the qn->qp pad mask inside the kernel.
    h_bias_vec = h_bias.reshape(glimpse).astype(jnp.float32)
    hbias_row = jnp.repeat(h_bias_vec, q_p)
    lane = jnp.arange(glimpse * q_p, dtype=jnp.int32) % q_p
    hbias_row = jnp.where(lane >= q_num, -jnp.inf, hbias_row).reshape(1, glimpse * q_p)

    fixed2 = lambda i: (0, 0)
    out_shape = (
        jax.ShapeDtypeStruct((B, glimpse, v_num, q_p), jnp.float32),   # p (padded)
        jax.ShapeDtypeStruct((B, glimpse, v_num, q_p), jnp.float32),   # logits (padded)
    )
    # TODO(synk): at production BAN sizes (v_dim=2048, hk=3072) on v7x (64 MiB
    # VMEM): keep the weights bf16, mark the constant-index-map weight/bias specs
    # pipeline_mode=pl.Buffered(1) (double-buffering a resident operand is waste),
    # and if still over budget add a trailing "arbitrary" reduction grid axis over
    # hk with an f32 accumulator + pl.when init/finalize; cap vmem_limit_bytes at
    # ~48-56 MiB there and raise it to ~96-112 MiB on v5e/v6e.
    # TODO(synk): if xprof shows the padded output DMA dominating at production
    # shapes, switch p/logits to a flattened (v_num*q_num)->next-128 last axis.
    kernel = functools.partial(_biattention_kernel, mm_dtype=mm_dtype,
                               fold_dtype=fold_dtype)
    p_pad, logits_pad = pl.pallas_call(
        kernel,
        out_shape=out_shape,
        grid=(B // block_b,),
        in_specs=[
            pl.BlockSpec((block_b, v_num, v_dim), lambda i: (i, 0, 0)),
            pl.BlockSpec((block_b, q_num, q_dim), lambda i: (i, 0, 0)),
            pl.BlockSpec((v_dim, hk_p), fixed2),                 # Wv^T (padded)
            pl.BlockSpec((1, hk_p), fixed2),                     # bv
            pl.BlockSpec((q_dim, hk_p), fixed2),                 # Wq^T (padded)
            pl.BlockSpec((1, hk_p), fixed2),                     # bq
            pl.BlockSpec((hk_p, glimpse), fixed2),               # h_mat^T
            pl.BlockSpec((1, glimpse * q_p), fixed2),            # h_bias row (+pad -inf)
        ],
        out_specs=(
            pl.BlockSpec((block_b, glimpse, v_num, q_p), lambda i: (i, 0, 0, 0)),
            pl.BlockSpec((block_b, glimpse, v_num, q_p), lambda i: (i, 0, 0, 0)),
        ),
        compiler_params=pltpu.CompilerParams(
            dimension_semantics=("parallel",),
            vmem_limit_bytes=32 * 1024 * 1024,
        ),
    )(v, q, wv_t, bv, wq_t, bq, h_t, hbias_row)

    # Strip the lane padding (layout plumbing only).
    return p_pad[..., :q_num], logits_pad[..., :q_num]


def _reference(v, q, wv_t, bv, wq_t, bq, h_mat, h_bias):
    B, vn, _ = v.shape
    qn = q.shape[1]
    g = h_mat.shape[0]
    v_ = jax.nn.relu(v @ wv_t + bv)
    q_ = jax.nn.relu(q @ wq_t + bq)
    logits = jnp.einsum('gk,bik,bjk->bgij', h_mat, v_, q_) + h_bias[None, :, 0, None, None]
    mask = jnp.sum(jnp.abs(v), axis=-1) == 0.0
    logits = jnp.where(mask[:, None, :, None], -jnp.inf, logits)
    p = jax.nn.softmax(logits.reshape(B, g, vn * qn), axis=-1).reshape(B, g, vn, qn)
    return p, logits


if __name__ == "__main__":
    # Small shapes consistent with BiAttention(x_dim, y_dim, z_dim, glimpse), k=3.
    B, v_num, q_num = 4, 8, 8
    v_dim, q_dim, h_dim, glimpse = 32, 32, 32, 4
    k = 3
    hk = h_dim * k  # 96

    key = jax.random.PRNGKey(0)
    kv, kq, k1, k2, k3, k4, k5, k6 = jax.random.split(key, 8)

    v = jax.random.normal(kv, (B, v_num, v_dim), dtype=jnp.float32)
    q = jax.random.normal(kq, (B, q_num, q_dim), dtype=jnp.float32)
    # Zero some v rows so the v_mask path is actually exercised.
    v = v.at[0, 6:].set(0.0)
    v = v.at[1, 3].set(0.0)
    v = v.at[3, 0].set(0.0)

    # Deterministic synthetic parameters (weight_norm at init == raw weights).
    wv_t = jax.random.normal(k1, (v_dim, hk), dtype=jnp.float32) * 0.1   # Wv^T
    bv = jax.random.normal(k2, (1, hk), dtype=jnp.float32) * 0.1
    wq_t = jax.random.normal(k3, (q_dim, hk), dtype=jnp.float32) * 0.1   # Wq^T
    bq = jax.random.normal(k4, (1, hk), dtype=jnp.float32) * 0.1
    h_mat = jax.random.normal(k5, (glimpse, hk), dtype=jnp.float32)      # Parameter.normal_()
    h_bias = jax.random.normal(k6, (glimpse, 1), dtype=jnp.float32)

    p_want, logits_want = _reference(v, q, wv_t, bv, wq_t, bq, h_mat, h_bias)

    # f32 MXU path: strict correctness check.
    p, logits = bi_attention(v, q, wv_t, bv, wq_t, bq, h_mat, h_bias,
                             block_b=2, use_bf16=False)
    jax.block_until_ready((p, logits))
    np.testing.assert_allclose(np.asarray(logits), np.asarray(logits_want),
                               rtol=1e-4, atol=1e-4)
    np.testing.assert_allclose(np.asarray(p), np.asarray(p_want),
                               rtol=1e-2, atol=1e-5)

    # bf16 MXU path, bf16 fold/transpose (v6e/v7x fast path): loose sanity check.
    p_bf, logits_bf = bi_attention(v, q, wv_t, bv, wq_t, bq, h_mat, h_bias,
                                   block_b=2, use_bf16=True)
    jax.block_until_ready((p_bf, logits_bf))
    max_dp = float(jnp.max(jnp.abs(p_bf - p_want)))
    assert max_dp < 0.1, f"bf16(fold) path drifted too far from reference: {max_dp}"

    # bf16 MXU operands, f32 fold/transpose (v5e-style path): loose sanity check.
    p_b5, logits_b5 = bi_attention(v, q, wv_t, bv, wq_t, bq, h_mat, h_bias,
                                   block_b=2, use_bf16=True, bf16_fold=False)
    jax.block_until_ready((p_b5, logits_b5))
    max_dp5 = float(jnp.max(jnp.abs(p_b5 - p_want)))
    assert max_dp5 < 0.1, f"bf16(f32-fold) path drifted too far from reference: {max_dp5}"

    print("KERNEL_OK")
</pallas_src>

<mosaic_0001>
module attributes {stable_mosaic.version = 11 : i64} {
  func.func @_biattention_kernel(%arg0: i32, %arg1: memref<2x8x32xf32, #tpu.memory_space<vmem>>, %arg2: memref<2x8x32xf32, #tpu.memory_space<vmem>>, %arg3: memref<32x128xf32, #tpu.memory_space<vmem>>, %arg4: memref<1x128xf32, #tpu.memory_space<vmem>>, %arg5: memref<32x128xf32, #tpu.memory_space<vmem>>, %arg6: memref<1x128xf32, #tpu.memory_space<vmem>>, %arg7: memref<128x4xf32, #tpu.memory_space<vmem>>, %arg8: memref<1x512xf32, #tpu.memory_space<vmem>>, %arg9: memref<2x4x8x128xf32, #tpu.memory_space<vmem>>, %arg10: memref<2x4x8x128xf32, #tpu.memory_space<vmem>>) attributes {dimension_semantics = [#tpu.dimension_semantics<parallel>], iteration_bounds = array<i64: 2>, scalar_prefetch = 0 : i64, scratch_operands = 0 : i64, tpu.core_type = #tpu.core_type<tc>, window_params = [{transform_indices = @transform_0, window_bounds = array<i64: 2, 8, 32>}, {transform_indices = @transform_1, window_bounds = array<i64: 2, 8, 32>}, {pipeline_mode = #tpu.pipeline_mode<synchronous>, transform_indices = @transform_2, window_bounds = array<i64: 32, 128>}, {pipeline_mode = #tpu.pipeline_mode<synchronous>, transform_indices = @transform_3, window_bounds = array<i64: 1, 128>}, {pipeline_mode = #tpu.pipeline_mode<synchronous>, transform_indices = @transform_4, window_bounds = array<i64: 32, 128>}, {pipeline_mode = #tpu.pipeline_mode<synchronous>, transform_indices = @transform_5, window_bounds = array<i64: 1, 128>}, {pipeline_mode = #tpu.pipeline_mode<synchronous>, transform_indices = @transform_6, window_bounds = array<i64: 128, 4>}, {pipeline_mode = #tpu.pipeline_mode<synchronous>, transform_indices = @transform_7, window_bounds = array<i64: 1, 512>}, {transform_indices = @transform_8, window_bounds = array<i64: 2, 4, 8, 128>}, {transform_indices = @transform_9, window_bounds = array<i64: 2, 4, 8, 128>}]} {
    %c0 = arith.constant 0 : index
    %c0_0 = arith.constant 0 : index
    %c0_1 = arith.constant 0 : index
    %0 = vector.load %arg1[%c0, %c0_0, %c0_1] : memref<2x8x32xf32, #tpu.memory_space<vmem>>, vector<2x8x32xf32>
    %1 = vector.shape_cast %0 : vector<2x8x32xf32> to vector<16x32xf32>
    %c0_2 = arith.constant 0 : index
    %c0_3 = arith.constant 0 : index
    %c0_4 = arith.constant 0 : index
    %2 = vector.load %arg2[%c0_2, %c0_3, %c0_4] : memref<2x8x32xf32, #tpu.memory_space<vmem>>, vector<2x8x32xf32>
    %3 = vector.shape_cast %2 : vector<2x8x32xf32> to vector<16x32xf32>
    %c0_5 = arith.constant 0 : index
    %c0_6 = arith.constant 0 : index
    %4 = vector.load %arg3[%c0_5, %c0_6] : memref<32x128xf32, #tpu.memory_space<vmem>>, vector<32x128xf32>
    %cst = arith.constant dense<0.000000e+00> : vector<16x128xf32>
    %5 = tpu.matmul %1, %4, %cst {dimension_numbers = #tpu.dot_dimension_numbers<[1], [0], [0], [1], [0, 0, 1, 1], [], []>} : vector<16x32xf32>, vector<32x128xf32>, vector<16x128xf32> -> vector<16x128xf32>
    %c0_7 = arith.constant 0 : index
    %c0_8 = arith.constant 0 : index
    %6 = vector.load %arg4[%c0_7, %c0_8] : memref<1x128xf32, #tpu.memory_space<vmem>>, vector<1x128xf32>
    %7 = vector.broadcast %6 : vector<1x128xf32> to vector<16x128xf32>
    %8 = arith.addf %5, %7 : vector<16x128xf32>
    %cst_9 = arith.constant 0.000000e+00 : f32
    %9 = vector.broadcast %cst_9 : f32 to vector<16x128xf32>
    %10 = arith.maximumf %8, %9 : vector<16x128xf32>
    %c0_10 = arith.constant 0 : index
    %c0_11 = arith.constant 0 : index
    %11 = vector.load %arg5[%c0_10, %c0_11] : memref<32x128xf32, #tpu.memory_space<vmem>>, vector<32x128xf32>
    %cst_12 = arith.constant dense<0.000000e+00> : vector<16x128xf32>
    %12 = tpu.matmul %3, %11, %cst_12 {dimension_numbers = #tpu.dot_dimension_numbers<[1], [0], [0], [1], [0, 0, 1, 1], [], []>} : vector<16x32xf32>, vector<32x128xf32>, vector<16x128xf32> -> vector<16x128xf32>
    %c0_13 = arith.constant 0 : index
    %c0_14 = arith.constant 0 : index
    %13 = vector.load %arg6[%c0_13, %c0_14] : memref<1x128xf32, #tpu.memory_space<vmem>>, vector<1x128xf32>
    %14 = vector.broadcast %13 : vector<1x128xf32> to vector<16x128xf32>
    %15 = arith.addf %12, %14 : vector<16x128xf32>
    %cst_15 = arith.constant 0.000000e+00 : f32
    %16 = vector.broadcast %cst_15 : f32 to vector<16x128xf32>
    %17 = arith.maximumf %15, %16 : vector<16x128xf32>
    %18 = tpu.transpose %17, [1, 0] : vector<16x128xf32> -> vector<128x16xf32>
    %c0_16 = arith.constant 0 : index
    %c0_17 = arith.constant 0 : index
    %19 = vector.load %arg7[%c0_16, %c0_17] : memref<128x4xf32, #tpu.memory_space<vmem>>, vector<128x4xf32>
    %20 = vector.extract_strided_slice %19 {offsets = [0, 0], sizes = [128, 1], strides = [1, 1]} : vector<128x4xf32> to vector<128x1xf32>
    %21 = vector.shape_cast %20 : vector<128x1xf32> to vector<128x1xf32>
    %22 = vector.broadcast %21 : vector<128x1xf32> to vector<128x128xf32>
    %23 = vector.extract_strided_slice %19 {offsets = [0, 1], sizes = [128, 1], strides = [1, 1]} : vector<128x4xf32> to vector<128x1xf32>
    %24 = vector.shape_cast %23 : vector<128x1xf32> to vector<128x1xf32>
    %25 = vector.broadcast %24 : vector<128x1xf32> to vector<128x128xf32>
    %26 = vector.extract_strided_slice %19 {offsets = [0, 2], sizes = [128, 1], strides = [1, 1]} : vector<128x4xf32> to vector<128x1xf32>
    %27 = vector.shape_cast %26 : vector<128x1xf32> to vector<128x1xf32>
    %28 = vector.broadcast %27 : vector<128x1xf32> to vector<128x128xf32>
    %29 = vector.extract_strided_slice %19 {offsets = [0, 3], sizes = [128, 1], strides = [1, 1]} : vector<128x4xf32> to vector<128x1xf32>
    %30 = vector.shape_cast %29 : vector<128x1xf32> to vector<128x1xf32>
    %31 = vector.broadcast %30 : vector<128x1xf32> to vector<128x128xf32>
    %cst_18 = arith.constant 0.000000e+00 : f32
    %32 = vector.broadcast %cst_18 : f32 to vector<128x120xf32>
    %c0_19 = arith.constant 0 : index
    %c0_20 = arith.constant 0 : index
    %33 = vector.load %arg8[%c0_19, %c0_20] : memref<1x512xf32, #tpu.memory_space<vmem>>, vector<1x512xf32>
    %34 = math.absf %1 : vector<16x32xf32>
    %cst_21 = arith.constant dense<0.000000e+00> : vector<16xf32>
    %35 = vector.multi_reduction <add>, %34, %cst_21 [1] : vector<16x32xf32> to vector<16xf32>
    %36 = vector.shape_cast %35 : vector<16xf32> to vector<16x1xf32>
    %cst_22 = arith.constant 0.000000e+00 : f32
    %37 = vector.broadcast %cst_22 : f32 to vector<16x1xf32>
    %38 = arith.cmpf oeq, %36, %37 : vector<16x1xf32>
    %39 = vector.extract_strided_slice %10 {offsets = [0, 0], sizes = [8, 128], strides = [1, 1]} : vector<16x128xf32> to vector<8x128xf32>
    %40 = vector.extract_strided_slice %18 {offsets = [0, 0], sizes = [128, 8], strides = [1, 1]} : vector<128x16xf32> to vector<128x8xf32>
    %41 = tpu.concatenate %40, %32 in 1 : vector<128x8xf32>, vector<128x120xf32> -> vector<128x128xf32>
    %42 = arith.mulf %41, %22 : vector<128x128xf32>
    %43 = arith.mulf %41, %25 : vector<128x128xf32>
    %44 = arith.mulf %41, %28 : vector<128x128xf32>
    %45 = arith.mulf %41, %31 : vector<128x128xf32>
    %46 = tpu.concatenate %42, %43, %44, %45 in 1 : vector<128x128xf32>, vector<128x128xf32>, vector<128x128xf32>, vector<128x128xf32> -> vector<128x512xf32>
    %cst_23 = arith.constant dense<0.000000e+00> : vector<8x512xf32>
    %47 = tpu.matmul %39, %46, %cst_23 {dimension_numbers = #tpu.dot_dimension_numbers<[1], [0], [0], [1], [0, 0, 1, 1], [], []>} : vector<8x128xf32>, vector<128x512xf32>, vector<8x512xf32> -> vector<8x512xf32>
    %48 = vector.broadcast %33 : vector<1x512xf32> to vector<8x512xf32>
    %49 = arith.addf %47, %48 : vector<8x512xf32>
    %50 = vector.extract_strided_slice %38 {offsets = [0, 0], sizes = [8, 1], strides = [1, 1]} : vector<16x1xi1> to vector<8x1xi1>
    %cst_24 = arith.constant 0xFF800000 : f32
    %51 = vector.shape_cast %50 : vector<8x1xi1> to vector<8x1xi1>
    %52 = vector.broadcast %51 : vector<8x1xi1> to vector<8x512xi1>
    %53 = vector.broadcast %cst_24 : f32 to vector<8x512xf32>
    %54 = arith.select %52, %53, %49 : vector<8x512xi1>, vector<8x512xf32>
    %55 = vector.extract_strided_slice %54 {offsets = [0, 0], sizes = [8, 128], strides = [1, 1]} : vector<8x512xf32> to vector<8x128xf32>
    %c0_25 = arith.constant 0 : index
    %c0_26 = arith.constant 0 : index
    %c0_27 = arith.constant 0 : index
    %c0_28 = arith.constant 0 : index
    %56 = vector.load %arg10[%c0_25, %c0_26, %c0_27, %c0_28] : memref<2x4x8x128xf32, #tpu.memory_space<vmem>>, vector<1x1x8x128xf32>
    %57 = vector.shape_cast %56 : vector<1x1x8x128xf32> to vector<8x128xf32>
    %58 = vector.shape_cast %55 : vector<8x128xf32> to vector<1x1x8x128xf32>
    tpu.vector_store %arg10[%c0_25, %c0_26, %c0_27, %c0_28], %58 {strides = array<i32>} : memref<2x4x8x128xf32, #tpu.memory_space<vmem>>, vector<1x1x8x128xf32>,
    %59 = vector.shape_cast %55 : vector<8x128xf32> to vector<1x8x128xf32>
    %cst_29 = arith.constant dense<0xFF800000> : vector<1xf32>
    %60 = vector.multi_reduction <maximumf>, %59, %cst_29 [1, 2] : vector<1x8x128xf32> to vector<1xf32>
    %61 = vector.shape_cast %60 : vector<1xf32> to vector<1x1x1xf32>
    %62 = vector.extract %61[0, 0, 0] : f32 from vector<1x1x1xf32>
    %63 = vector.broadcast %62 : f32 to vector<1x1xf32>
    %64 = vector.broadcast %63 : vector<1x1xf32> to vector<8x128xf32>
    %65 = arith.subf %55, %64 : vector<8x128xf32>
    %66 = math.exp %65 : vector<8x128xf32>
    %67 = vector.shape_cast %66 : vector<8x128xf32> to vector<1x8x128xf32>
    %cst_30 = arith.constant dense<0.000000e+00> : vector<1xf32>
    %68 = vector.multi_reduction <add>, %67, %cst_30 [1, 2] : vector<1x8x128xf32> to vector<1xf32>
    %69 = vector.shape_cast %68 : vector<1xf32> to vector<1x1x1xf32>
    %70 = vector.extract %69[0, 0, 0] : f32 from vector<1x1x1xf32>
    %71 = vector.broadcast %70 : f32 to vector<1x1xf32>
    %72 = tpu.reciprocal %71 {approx = true} : vector<1x1xf32> -> vector<1x1xf32>
    %73 = vector.broadcast %72 : vector<1x1xf32> to vector<8x128xf32>
    %74 = arith.mulf %66, %73 : vector<8x128xf32>
    %c0_31 = arith.constant 0 : index
    %c0_32 = arith.constant 0 : index
    %c0_33 = arith.constant 0 : index
    %c0_34 = arith.constant 0 : index
    %75 = vector.load %arg9[%c0_31, %c0_32, %c0_33, %c0_34] : memref<2x4x8x128xf32, #tpu.memory_space<vmem>>, vector<1x1x8x128xf32>
    %76 = vector.shape_cast %75 : vector<1x1x8x128xf32> to vector<8x128xf32>
    %77 = vector.shape_cast %74 : vector<8x128xf32> to vector<1x1x8x128xf32>
    tpu.vector_store %arg9[%c0_31, %c0_32, %c0_33, %c0_34], %77 {strides = array<i32>} : memref<2x4x8x128xf32, #tpu.memory_space<vmem>>, vector<1x1x8x128xf32>,
    %78 = vector.extract_strided_slice %54 {offsets = [0, 128], sizes = [8, 128], strides = [1, 1]} : vector<8x512xf32> to vector<8x128xf32>
    %c0_35 = arith.constant 0 : index
    %c1 = arith.constant 1 : index
    %c0_36 = arith.constant 0 : index
    %c0_37 = arith.constant 0 : index
    %79 = vector.load %arg10[%c0_35, %c1, %c0_36, %c0_37] : memref<2x4x8x128xf32, #tpu.memory_space<vmem>>, vector<1x1x8x128xf32>
    %80 = vector.shape_cast %79 : vector<1x1x8x128xf32> to vector<8x128xf32>
    %81 = vector.shape_cast %78 : vector<8x128xf32> to vector<1x1x8x128xf32>
    tpu.vector_store %arg10[%c0_35, %c1, %c0_36, %c0_37], %81 {strides = array<i32>} : memref<2x4x8x128xf32, #tpu.memory_space<vmem>>, vector<1x1x8x128xf32>,
    %82 = vector.shape_cast %78 : vector<8x128xf32> to vector<1x8x128xf32>
    %cst_38 = arith.constant dense<0xFF800000> : vector<1xf32>
    %83 = vector.multi_reduction <maximumf>, %82, %cst_38 [1, 2] : vector<1x8x128xf32> to vector<1xf32>
    %84 = vector.shape_cast %83 : vector<1xf32> to vector<1x1x1xf32>
    %85 = vector.extract %84[0, 0, 0] : f32 from vector<1x1x1xf32>
    %86 = vector.broadcast %85 : f32 to vector<1x1xf32>
    %87 = vector.broadcast %86 : vector<1x1xf32> to vector<8x128xf32>
    %88 = arith.subf %78, %87 : vector<8x128xf32>
    %89 = math.exp %88 : vector<8x128xf32>
    %90 = vector.shape_cast %89 : vector<8x128xf32> to vector<1x8x128xf32>
    %cst_39 = arith.constant dense<0.000000e+00> : vector<1xf32>
    %91 = vector.multi_reduction <add>, %90, %cst_39 [1, 2] : vector<1x8x128xf32> to vector<1xf32>
    %92 = vector.shape_cast %91 : vector<1xf32> to vector<1x1x1xf32>
    %93 = vector.extract %92[0, 0, 0] : f32 from vector<1x1x1xf32>
    %94 = vector.broadcast %93 : f32 to vector<1x1xf32>
    %95 = tpu.reciprocal %94 {approx = true} : vector<1x1xf32> -> vector<1x1xf32>
    %96 = vector.broadcast %95 : vector<1x1xf32> to vector<8x128xf32>
    %97 = arith.mulf %89, %96 : vector<8x128xf32>
    %c0_40 = arith.constant 0 : index
    %c1_41 = arith.constant 1 : index
    %c0_42 = arith.constant 0 : index
    %c0_43 = arith.constant 0 : index
    %98 = vector.load %arg9[%c0_40, %c1_41, %c0_42, %c0_43] : memref<2x4x8x128xf32, #tpu.memory_space<vmem>>, vector<1x1x8x128xf32>
    %99 = vector.shape_cast %98 : vector<1x1x8x128xf32> to vector<8x128xf32>
    %100 = vector.shape_cast %97 : vector<8x128xf32> to vector<1x1x8x128xf32>
    tpu.vector_store %arg9[%c0_40, %c1_41, %c0_42, %c0_43], %100 {strides = array<i32>} : memref<2x4x8x128xf32, #tpu.memory_space<vmem>>, vector<1x1x8x128xf32>,
    %101 = vector.extract_strided_slice %54 {offsets = [0, 256], sizes = [8, 128], strides = [1, 1]} : vector<8x512xf32> to vector<8x128xf32>
    %c0_44 = arith.constant 0 : index
    %c2 = arith.constant 2 : index
    %c0_45 = arith.constant 0 : index
    %c0_46 = arith.constant 0 : index
    %102 = vector.load %arg10[%c0_44, %c2, %c0_45, %c0_46] : memref<2x4x8x128xf32, #tpu.memory_space<vmem>>, vector<1x1x8x128xf32>
    %103 = vector.shape_cast %102 : vector<1x1x8x128xf32> to vector<8x128xf32>
    %104 = vector.shape_cast %101 : vector<8x128xf32> to vector<1x1x8x128xf32>
    tpu.vector_store %arg10[%c0_44, %c2, %c0_45, %c0_46], %104 {strides = array<i32>} : memref<2x4x8x128xf32, #tpu.memory_space<vmem>>, vector<1x1x8x128xf32>,
    %105 = vector.shape_cast %101 : vector<8x128xf32> to vector<1x8x128xf32>
    %cst_47 = arith.constant dense<0xFF800000> : vector<1xf32>
    %106 = vector.multi_reduction <maximumf>, %105, %cst_47 [1, 2] : vector<1x8x128xf32> to vector<1xf32>
    %107 = vector.shape_cast %106 : vector<1xf32> to vector<1x1x1xf32>
    %108 = vector.extract %107[0, 0, 0] : f32 from vector<1x1x1xf32>
    %109 = vector.broadcast %108 : f32 to vector<1x1xf32>
    %110 = vector.broadcast %109 : vector<1x1xf32> to vector<8x128xf32>
    %111 = arith.subf %101, %110 : vector<8x128xf32>
    %112 = math.exp %111 : vector<8x128xf32>
    %113 = vector.shape_cast %112 : vector<8x128xf32> to vector<1x8x128xf32>
    %cst_48 = arith.constant dense<0.000000e+00> : vector<1xf32>
    %114 = vector.multi_reduction <add>, %113, %cst_48 [1, 2] : vector<1x8x128xf32> to vector<1xf32>
    %115 = vector.shape_cast %114 : vector<1xf32> to vector<1x1x1xf32>
    %116 = vector.extract %115[0, 0, 0] : f32 from vector<1x1x1xf32>
    %117 = vector.broadcast %116 : f32 to vector<1x1xf32>
    %118 = tpu.reciprocal %117 {approx = true} : vector<1x1xf32> -> vector<1x1xf32>
    %119 = vector.broadcast %118 : vector<1x1xf32> to vector<8x128xf32>
    %120 = arith.mulf %112, %119 : vector<8x128xf32>
    %c0_49 = arith.constant 0 : index
    %c2_50 = arith.constant 2 : index
    %c0_51 = arith.constant 0 : index
    %c0_52 = arith.constant 0 : index
    %121 = vector.load %arg9[%c0_49, %c2_50, %c0_51, %c0_52] : memref<2x4x8x128xf32, #tpu.memory_space<vmem>>, vector<1x1x8x128xf32>
    %122 = vector.shape_cast %121 : vector<1x1x8x128xf32> to vector<8x128xf32>
    %123 = vector.shape_cast %120 : vector<8x128xf32> to vector<1x1x8x128xf32>
    tpu.vector_store %arg9[%c0_49, %c2_50, %c0_51, %c0_52], %123 {strides = array<i32>} : memref<2x4x8x128xf32, #tpu.memory_space<vmem>>, vector<1x1x8x128xf32>,
    %124 = vector.extract_strided_slice %54 {offsets = [0, 384], sizes = [8, 128], strides = [1, 1]} : vector<8x512xf32> to vector<8x128xf32>
    %c0_53 = arith.constant 0 : index
    %c3 = arith.constant 3 : index
    %c0_54 = arith.constant 0 : index
    %c0_55 = arith.constant 0 : index
    %125 = vector.load %arg10[%c0_53, %c3, %c0_54, %c0_55] : memref<2x4x8x128xf32, #tpu.memory_space<vmem>>, vector<1x1x8x128xf32>
    %126 = vector.shape_cast %125 : vector<1x1x8x128xf32> to vector<8x128xf32>
    %127 = vector.shape_cast %124 : vector<8x128xf32> to vector<1x1x8x128xf32>
    tpu.vector_store %arg10[%c0_53, %c3, %c0_54, %c0_55], %127 {strides = array<i32>} : memref<2x4x8x128xf32, #tpu.memory_space<vmem>>, vector<1x1x8x128xf32>,
    %128 = vector.shape_cast %124 : vector<8x128xf32> to vector<1x8x128xf32>
    %cst_56 = arith.constant dense<0xFF800000> : vector<1xf32>
    %129 = vector.multi_reduction <maximumf>, %128, %cst_56 [1, 2] : vector<1x8x128xf32> to vector<1xf32>
    %130 = vector.shape_cast %129 : vector<1xf32> to vector<1x1x1xf32>
    %131 = vector.extract %130[0, 0, 0] : f32 from vector<1x1x1xf32>
    %132 = vector.broadcast %131 : f32 to vector<1x1xf32>
    %133 = vector.broadcast %132 : vector<1x1xf32> to vector<8x128xf32>
    %134 = arith.subf %124, %133 : vector<8x128xf32>
    %135 = math.exp %134 : vector<8x128xf32>
    %136 = vector.shape_cast %135 : vector<8x128xf32> to vector<1x8x128xf32>
    %cst_57 = arith.constant dense<0.000000e+00> : vector<1xf32>
    %137 = vector.multi_reduction <add>, %136, %cst_57 [1, 2] : vector<1x8x128xf32> to vector<1xf32>
    %138 = vector.shape_cast %137 : vector<1xf32> to vector<1x1x1xf32>
    %139 = vector.extract %138[0, 0, 0] : f32 from vector<1x1x1xf32>
    %140 = vector.broadcast %139 : f32 to vector<1x1xf32>
    %141 = tpu.reciprocal %140 {approx = true} : vector<1x1xf32> -> vector<1x1xf32>
    %142 = vector.broadcast %141 : vector<1x1xf32> to vector<8x128xf32>
    %143 = arith.mulf %135, %142 : vector<8x128xf32>
    %c0_58 = arith.constant 0 : index
    %c3_59 = arith.constant 3 : index
    %c0_60 = arith.constant 0 : index
    %c0_61 = arith.constant 0 : index
    %144 = vector.load %arg9[%c0_58, %c3_59, %c0_60, %c0_61] : memref<2x4x8x128xf32, #tpu.memory_space<vmem>>, vector<1x1x8x128xf32>
    %145 = vector.shape_cast %144 : vector<1x1x8x128xf32> to vector<8x128xf32>
    %146 = vector.shape_cast %143 : vector<8x128xf32> to vector<1x1x8x128xf32>
    tpu.vector_store %arg9[%c0_58, %c3_59, %c0_60, %c0_61], %146 {strides = array<i32>} : memref<2x4x8x128xf32, #tpu.memory_space<vmem>>, vector<1x1x8x128xf32>,
    %147 = vector.extract_strided_slice %10 {offsets = [8, 0], sizes = [8, 128], strides = [1, 1]} : vector<16x128xf32> to vector<8x128xf32>
    %148 = vector.extract_strided_slice %18 {offsets = [0, 8], sizes = [128, 8], strides = [1, 1]} : vector<128x16xf32> to vector<128x8xf32>
    %149 = tpu.concatenate %148, %32 in 1 : vector<128x8xf32>, vector<128x120xf32> -> vector<128x128xf32>
    %150 = arith.mulf %149, %22 : vector<128x128xf32>
    %151 = arith.mulf %149, %25 : vector<128x128xf32>
    %152 = arith.mulf %149, %28 : vector<128x128xf32>
    %153 = arith.mulf %149, %31 : vector<128x128xf32>
    %154 = tpu.concatenate %150, %151, %152, %153 in 1 : vector<128x128xf32>, vector<128x128xf32>, vector<128x128xf32>, vector<128x128xf32> -> vector<128x512xf32>
    %cst_62 = arith.constant dense<0.000000e+00> : vector<8x512xf32>
    %155 = tpu.matmul %147, %154, %cst_62 {dimension_numbers = #tpu.dot_dimension_numbers<[1], [0], [0], [1], [0, 0, 1, 1], [], []>} : vector<8x128xf32>, vector<128x512xf32>, vector<8x512xf32> -> vector<8x512xf32>
    %156 = vector.broadcast %33 : vector<1x512xf32> to vector<8x512xf32>
    %157 = arith.addf %155, %156 : vector<8x512xf32>
    %158 = vector.extract_strided_slice %38 {offsets = [8, 0], sizes = [8, 1], strides = [1, 1]} : vector<16x1xi1> to vector<8x1xi1>
    %cst_63 = arith.constant 0xFF800000 : f32
    %159 = vector.shape_cast %158 : vector<8x1xi1> to vector<8x1xi1>
    %160 = vector.broadcast %159 : vector<8x1xi1> to vector<8x512xi1>
    %161 = vector.broadcast %cst_63 : f32 to vector<8x512xf32>
    %162 = arith.select %160, %161, %157 : vector<8x512xi1>, vector<8x512xf32>
    %163 = vector.extract_strided_slice %162 {offsets = [0, 0], sizes = [8, 128], strides = [1, 1]} : vector<8x512xf32> to vector<8x128xf32>
    %c1_64 = arith.constant 1 : index
    %c0_65 = arith.constant 0 : index
    %c0_66 = arith.constant 0 : index
    %c0_67 = arith.constant 0 : index
    %164 = vector.load %arg10[%c1_64, %c0_65, %c0_66, %c0_67] : memref<2x4x8x128xf32, #tpu.memory_space<vmem>>, vector<1x1x8x128xf32>
    %165 = vector.shape_cast %164 : vector<1x1x8x128xf32> to vector<8x128xf32>
    %166 = vector.shape_cast %163 : vector<8x128xf32> to vector<1x1x8x128xf32>
    tpu.vector_store %arg10[%c1_64, %c0_65, %c0_66, %c0_67], %166 {strides = array<i32>} : memref<2x4x8x128xf32, #tpu.memory_space<vmem>>, vector<1x1x8x128xf32>,
    %167 = vector.shape_cast %163 : vector<8x128xf32> to vector<1x8x128xf32>
    %cst_68 = arith.constant dense<0xFF800000> : vector<1xf32>
    %168 = vector.multi_reduction <maximumf>, %167, %cst_68 [1, 2] : vector<1x8x128xf32> to vector<1xf32>
    %169 = vector.shape_cast %168 : vector<1xf32> to vector<1x1x1xf32>
    %170 = vector.extract %169[0, 0, 0] : f32 from vector<1x1x1xf32>
    %171 = vector.broadcast %170 : f32 to vector<1x1xf32>
    %172 = vector.broadcast %171 : vector<1x1xf32> to vector<8x128xf32>
    %173 = arith.subf %163, %172 : vector<8x128xf32>
    %174 = math.exp %173 : vector<8x128xf32>
    %175 = vector.shape_cast %174 : vector<8x128xf32> to vector<1x8x128xf32>
    %cst_69 = arith.constant dense<0.000000e+00> : vector<1xf32>
    %176 = vector.multi_reduction <add>, %175, %cst_69 [1, 2] : vector<1x8x128xf32> to vector<1xf32>
    %177 = vector.shape_cast %176 : vector<1xf32> to vector<1x1x1xf32>
    %178 = vector.extract %177[0, 0, 0] : f32 from vector<1x1x1xf32>
    %179 = vector.broadcast %178 : f32 to vector<1x1xf32>
    %180 = tpu.reciprocal %179 {approx = true} : vector<1x1xf32> -> vector<1x1xf32>
    %181 = vector.broadcast %180 : vector<1x1xf32> to vector<8x128xf32>
    %182 = arith.mulf %174, %181 : vector<8x128xf32>
    %c1_70 = arith.constant 1 : index
    %c0_71 = arith.constant 0 : index
    %c0_72 = arith.constant 0 : index
    %c0_73 = arith.constant 0 : index
    %183 = vector.load %arg9[%c1_70, %c0_71, %c0_72, %c0_73] : memref<2x4x8x128xf32, #tpu.memory_space<vmem>>, vector<1x1x8x128xf32>
    %184 = vector.shape_cast %183 : vector<1x1x8x128xf32> to vector<8x128xf32>
    %185 = vector.shape_cast %182 : vector<8x128xf32> to vector<1x1x8x128xf32>
    tpu.vector_store %arg9[%c1_70, %c0_71, %c0_72, %c0_73], %185 {strides = array<i32>} : memref<2x4x8x128xf32, #tpu.memory_space<vmem>>, vector<1x1x8x128xf32>,
    %186 = vector.extract_strided_slice %162 {offsets = [0, 128], sizes = [8, 128], strides = [1, 1]} : vector<8x512xf32> to vector<8x128xf32>
    %c1_74 = arith.constant 1 : index
    %c1_75 = arith.constant 1 : index
    %c0_76 = arith.constant 0 : index
    %c0_77 = arith.constant 0 : index
    %187 = vector.load %arg10[%c1_74, %c1_75, %c0_76, %c0_77] : memref<2x4x8x128xf32, #tpu.memory_space<vmem>>, vector<1x1x8x128xf32>
    %188 = vector.shape_cast %187 : vector<1x1x8x128xf32> to vector<8x128xf32>
    %189 = vector.shape_cast %186 : vector<8x128xf32> to vector<1x1x8x128xf32>
    tpu.vector_store %arg10[%c1_74, %c1_75, %c0_76, %c0_77], %189 {strides = array<i32>} : memref<2x4x8x128xf32, #tpu.memory_space<vmem>>, vector<1x1x8x128xf32>,
    %190 = vector.shape_cast %186 : vector<8x128xf32> to vector<1x8x128xf32>
    %cst_78 = arith.constant dense<0xFF800000> : vector<1xf32>
    %191 = vector.multi_reduction <maximumf>, %190, %cst_78 [1, 2] : vector<1x8x128xf32> to vector<1xf32>
    %192 = vector.shape_cast %191 : vector<1xf32> to vector<1x1x1xf32>
    %193 = vector.extract %192[0, 0, 0] : f32 from vector<1x1x1xf32>
    %194 = vector.broadcast %193 : f32 to vector<1x1xf32>
    %195 = vector.broadcast %194 : vector<1x1xf32> to vector<8x128xf32>
    %196 = arith.subf %186, %195 : vector<8x128xf32>
    %197 = math.exp %196 : vector<8x128xf32>
    %198 = vector.shape_cast %197 : vector<8x128xf32> to vector<1x8x128xf32>
    %cst_79 = arith.constant dense<0.000000e+00> : vector<1xf32>
    %199 = vector.multi_reduction <add>, %198, %cst_79 [1, 2] : vector<1x8x128xf32> to vector<1xf32>
    %200 = vector.shape_cast %199 : vector<1xf32> to vector<1x1x1xf32>
    %201 = vector.extract %200[0, 0, 0] : f32 from vector<1x1x1xf32>
    %202 = vector.broadcast %201 : f32 to vector<1x1xf32>
    %203 = tpu.reciprocal %202 {approx = true} : vector<1x1xf32> -> vector<1x1xf32>
    %204 = vector.broadcast %203 : vector<1x1xf32> to vector<8x128xf32>
    %205 = arith.mulf %197, %204 : vector<8x128xf32>
    %c1_80 = arith.constant 1 : index
    %c1_81 = arith.constant 1 : index
    %c0_82 = arith.constant 0 : index
    %c0_83 = arith.constant 0 : index
    %206 = vector.load %arg9[%c1_80, %c1_81, %c0_82, %c0_83] : memref<2x4x8x128xf32, #tpu.memory_space<vmem>>, vector<1x1x8x128xf32>
    %207 = vector.shape_cast %206 : vector<1x1x8x128xf32> to vector<8x128xf32>
    %208 = vector.shape_cast %205 : vector<8x128xf32> to vector<1x1x8x128xf32>
    tpu.vector_store %arg9[%c1_80, %c1_81, %c0_82, %c0_83], %208 {strides = array<i32>} : memref<2x4x8x128xf32, #tpu.memory_space<vmem>>, vector<1x1x8x128xf32>,
    %209 = vector.extract_strided_slice %162 {offsets = [0, 256], sizes = [8, 128], strides = [1, 1]} : vector<8x512xf32> to vector<8x128xf32>
    %c1_84 = arith.constant 1 : index
    %c2_85 = arith.constant 2 : index
    %c0_86 = arith.constant 0 : index
    %c0_87 = arith.constant 0 : index
    %210 = vector.load %arg10[%c1_84, %c2_85, %c0_86, %c0_87] : memref<2x4x8x128xf32, #tpu.memory_space<vmem>>, vector<1x1x8x128xf32>
    %211 = vector.shape_cast %210 : vector<1x1x8x128xf32> to vector<8x128xf32>
    %212 = vector.shape_cast %209 : vector<8x128xf32> to vector<1x1x8x128xf32>
    tpu.vector_store %arg10[%c1_84, %c2_85, %c0_86, %c0_87], %212 {strides = array<i32>} : memref<2x4x8x128xf32, #tpu.memory_space<vmem>>, vector<1x1x8x128xf32>,
    %213 = vector.shape_cast %209 : vector<8x128xf32> to vector<1x8x128xf32>
    %cst_88 = arith.constant dense<0xFF800000> : vector<1xf32>
    %214 = vector.multi_reduction <maximumf>, %213, %cst_88 [1, 2] : vector<1x8x128xf32> to vector<1xf32>
    %215 = vector.shape_cast %214 : vector<1xf32> to vector<1x1x1xf32>
    %216 = vector.extract %215[0, 0, 0] : f32 from vector<1x1x1xf32>
    %217 = vector.broadcast %216 : f32 to vector<1x1xf32>
    %218 = vector.broadcast %217 : vector<1x1xf32> to vector<8x128xf32>
    %219 = arith.subf %209, %218 : vector<8x128xf32>
    %220 = math.exp %219 : vector<8x128xf32>
    %221 = vector.shape_cast %220 : vector<8x128xf32> to vector<1x8x128xf32>
    %cst_89 = arith.constant dense<0.000000e+00> : vector<1xf32>
    %222 = vector.multi_reduction <add>, %221, %cst_89 [1, 2] : vector<1x8x128xf32> to vector<1xf32>
    %223 = vector.shape_cast %222 : vector<1xf32> to vector<1x1x1xf32>
    %224 = vector.extract %223[0, 0, 0] : f32 from vector<1x1x1xf32>
    %225 = vector.broadcast %224 : f32 to vector<1x1xf32>
    %226 = tpu.reciprocal %225 {approx = true} : vector<1x1xf32> -> vector<1x1xf32>
    %227 = vector.broadcast %226 : vector<1x1xf32> to vector<8x128xf32>
    %228 = arith.mulf %220, %227 : vector<8x128xf32>
    %c1_90 = arith.constant 1 : index
    %c2_91 = arith.constant 2 : index
    %c0_92 = arith.constant 0 : index
    %c0_93 = arith.constant 0 : index
    %229 = vector.load %arg9[%c1_90, %c2_91, %c0_92, %c0_93] : memref<2x4x8x128xf32, #tpu.memory_space<vmem>>, vector<1x1x8x128xf32>
    %230 = vector.shape_cast %229 : vector<1x1x8x128xf32> to vector<8x128xf32>
    %231 = vector.shape_cast %228 : vector<8x128xf32> to vector<1x1x8x128xf32>
    tpu.vector_store %arg9[%c1_90, %c2_91, %c0_92, %c0_93], %231 {strides = array<i32>} : memref<2x4x8x128xf32, #tpu.memory_space<vmem>>, vector<1x1x8x128xf32>,
    %232 = vector.extract_strided_slice %162 {offsets = [0, 384], sizes = [8, 128], strides = [1, 1]} : vector<8x512xf32> to vector<8x128xf32>
    %c1_94 = arith.constant 1 : index
    %c3_95 = arith.constant 3 : index
    %c0_96 = arith.constant 0 : index
    %c0_97 = arith.constant 0 : index
    %233 = vector.load %arg10[%c1_94, %c3_95, %c0_96, %c0_97] : memref<2x4x8x128xf32, #tpu.memory_space<vmem>>, vector<1x1x8x128xf32>
    %234 = vector.shape_cast %233 : vector<1x1x8x128xf32> to vector<8x128xf32>
    %235 = vector.shape_cast %232 : vector<8x128xf32> to vector<1x1x8x128xf32>
    tpu.vector_store %arg10[%c1_94, %c3_95, %c0_96, %c0_97], %235 {strides = array<i32>} : memref<2x4x8x128xf32, #tpu.memory_space<vmem>>, vector<1x1x8x128xf32>,
    %236 = vector.shape_cast %232 : vector<8x128xf32> to vector<1x8x128xf32>
    %cst_98 = arith.constant dense<0xFF800000> : vector<1xf32>
    %237 = vector.multi_reduction <maximumf>, %236, %cst_98 [1, 2] : vector<1x8x128xf32> to vector<1xf32>
    %238 = vector.shape_cast %237 : vector<1xf32> to vector<1x1x1xf32>
    %239 = vector.extract %238[0, 0, 0] : f32 from vector<1x1x1xf32>
    %240 = vector.broadcast %239 : f32 to vector<1x1xf32>
    %241 = vector.broadcast %240 : vector<1x1xf32> to vector<8x128xf32>
    %242 = arith.subf %232, %241 : vector<8x128xf32>
    %243 = math.exp %242 : vector<8x128xf32>
    %244 = vector.shape_cast %243 : vector<8x128xf32> to vector<1x8x128xf32>
    %cst_99 = arith.constant dense<0.000000e+00> : vector<1xf32>
    %245 = vector.multi_reduction <add>, %244, %cst_99 [1, 2] : vector<1x8x128xf32> to vector<1xf32>
    %246 = vector.shape_cast %245 : vector<1xf32> to vector<1x1x1xf32>
    %247 = vector.extract %246[0, 0, 0] : f32 from vector<1x1x1xf32>
    %248 = vector.broadcast %247 : f32 to vector<1x1xf32>
    %249 = tpu.reciprocal %248 {approx = true} : vector<1x1xf32> -> vector<1x1xf32>
    %250 = vector.broadcast %249 : vector<1x1xf32> to vector<8x128xf32>
    %251 = arith.mulf %243, %250 : vector<8x128xf32>
    %c1_100 = arith.constant 1 : index
    %c3_101 = arith.constant 3 : index
    %c0_102 = arith.constant 0 : index
    %c0_103 = arith.constant 0 : index
    %252 = vector.load %arg9[%c1_100, %c3_101, %c0_102, %c0_103] : memref<2x4x8x128xf32, #tpu.memory_space<vmem>>, vector<1x1x8x128xf32>
    %253 = vector.shape_cast %252 : vector<1x1x8x128xf32> to vector<8x128xf32>
    %254 = vector.shape_cast %251 : vector<8x128xf32> to vector<1x1x8x128xf32>
    tpu.vector_store %arg9[%c1_100, %c3_101, %c0_102, %c0_103], %254 {strides = array<i32>} : memref<2x4x8x128xf32, #tpu.memory_space<vmem>>, vector<1x1x8x128xf32>,
    return
  }
  func.func @transform_0(%arg0: i32) -> (i32, i32, i32) {
    %c0_i32 = arith.constant 0 : i32
    %c0_i32_0 = arith.constant 0 : i32
    %c0_i32_1 = arith.constant 0 : i32
    return %arg0, %c0_i32, %c0_i32_0 : i32, i32, i32
  }
  func.func @transform_1(%arg0: i32) -> (i32, i32, i32) {
    %c0_i32 = arith.constant 0 : i32
    %c0_i32_0 = arith.constant 0 : i32
    %c0_i32_1 = arith.constant 0 : i32
    return %arg0, %c0_i32, %c0_i32_0 : i32, i32, i32
  }
  func.func @transform_2(%arg0: i32) -> (i32, i32) {
    %c0_i32 = arith.constant 0 : i32
    %c0_i32_0 = arith.constant 0 : i32
    %c0_i32_1 = arith.constant 0 : i32
    return %c0_i32, %c0_i32_0 : i32, i32
  }
  func.func @transform_3(%arg0: i32) -> (i32, i32) {
    %c0_i32 = arith.constant 0 : i32
    %c0_i32_0 = arith.constant 0 : i32
    %c0_i32_1 = arith.constant 0 : i32
    return %c0_i32, %c0_i32_0 : i32, i32
  }
  func.func @transform_4(%arg0: i32) -> (i32, i32) {
    %c0_i32 = arith.constant 0 : i32
    %c0_i32_0 = arith.constant 0 : i32
    %c0_i32_1 = arith.constant 0 : i32
    return %c0_i32, %c0_i32_0 : i32, i32
  }
  func.func @transform_5(%arg0: i32) -> (i32, i32) {
    %c0_i32 = arith.constant 0 : i32
    %c0_i32_0 = arith.constant 0 : i32
    %c0_i32_1 = arith.constant 0 : i32
    return %c0_i32, %c0_i32_0 : i32, i32
  }
  func.func @transform_6(%arg0: i32) -> (i32, i32) {
    %c0_i32 = arith.constant 0 : i32
    %c0_i32_0 = arith.constant 0 : i32
    %c0_i32_1 = arith.constant 0 : i32
    return %c0_i32, %c0_i32_0 : i32, i32
  }
  func.func @transform_7(%arg0: i32) -> (i32, i32) {
    %c0_i32 = arith.constant 0 : i32
    %c0_i32_0 = arith.constant 0 : i32
    %c0_i32_1 = arith.constant 0 : i32
    return %c0_i32, %c0_i32_0 : i32, i32
  }
  func.func @transform_8(%arg0: i32) -> (i32, i32, i32, i32) {
    %c0_i32 = arith.constant 0 : i32
    %c0_i32_0 = arith.constant 0 : i32
    %c0_i32_1 = arith.constant 0 : i32
    %c0_i32_2 = arith.constant 0 : i32
    return %arg0, %c0_i32, %c0_i32_0, %c0_i32_1 : i32, i32, i32, i32
  }
  func.func @transform_9(%arg0: i32) -> (i32, i32, i32, i32) {
    %c0_i32 = arith.constant 0 : i32
    %c0_i32_0 = arith.constant 0 : i32
    %c0_i32_1 = arith.constant 0 : i32
    %c0_i32_2 = arith.constant 0 : i32
    return %arg0, %c0_i32, %c0_i32_0, %c0_i32_1 : i32, i32, i32, i32
  }
}

</mosaic_0001>

<llo_original>
// kernel: tpu_custom_call.1
$region0: #{tpu_custom_call.1}
  #allocation0 [shape = 'u32[]', space=smem, size = 0x4, offset = 0x4, fixed_abs, tag = 'smem constant byte address 0x4 - core index']
  #allocation1 [shape = 'u32[144,128]{1,0:T(1,128)}', space=vmem, size = 0x12000, scoped, tag = 'internal scratch']
  %s0 = inlined_call_operand.vmem [shape: f32[4,8,32], index: 0, kind: input, shape index: {}]
  %s1 = inlined_call_operand.vmem [shape: f32[4,8,32], index: 1, kind: input, shape index: {}]
  %s2 = inlined_call_operand.vmem [shape: f32[32,128], index: 2, kind: input, shape index: {}]
  %s3 = inlined_call_operand.vmem [shape: f32[1,128], index: 3, kind: input, shape index: {}]
  %s4 = inlined_call_operand.vmem [shape: f32[32,128], index: 4, kind: input, shape index: {}]
  %s5 = inlined_call_operand.vmem [shape: f32[1,128], index: 5, kind: input, shape index: {}]
  %s6 = inlined_call_operand.vmem [shape: f32[128,4], index: 6, kind: input, shape index: {}]
  %s7 = inlined_call_operand.vmem [shape: f32[1,512], index: 7, kind: input, shape index: {}]
  %s8 = inlined_call_operand.hbm [shape: f32[4,4,8,128], index: 8, kind: output, shape index: {0}]
  %s9 = inlined_call_operand.hbm [shape: f32[4,4,8,128], index: 9, kind: output, shape index: {1}]
  %10 = xla_tuple %s8, %s9
  %s11 = sld [smem:[#allocation0]]
  $region73: #{tpu_custom_call.1} parent=0
    _
  %s13 = ssub.s32 1, %s11
  %s14 = scalar_select 0, %s13, %s11
  $region1: #{tpu_custom_call.1} parent=0
    #allocation2 [shape = 'u8[65536]{0}', space=vmem, size = 0x10000, scoped, tag = 'output window, operand 0']
    #allocation3 [shape = 's32[2]{0}', space=sflag, size = 0x8, scoped, tag = 'scoped memory for tpu_custom_call.1']
    #allocation4 [shape = 'u8[65536]{0}', space=vmem, size = 0x10000, scoped, tag = 'output window, operand 1']
    #allocation5 [shape = 's32[2]{0}', space=sflag, size = 0x8, scoped, tag = 'scoped memory for tpu_custom_call.1']
    %15 = vsyncpa [#allocation3], 0
    %s16 = scalar_lea.sflag [#allocation3], 1
    %17 = vsyncpa %s16, 0
    %18 = vsyncpa [#allocation5], 0
    %s19 = scalar_lea.sflag [#allocation5], 1
    %20 = vsyncpa %s19, 0
    loop: start=0, step=1, limit=4
    $region2: #{tpu_custom_call.1} parent=1 // loop_pre_header
      _
    $region3: #{tpu_custom_call.1} parent=1 // loop_header
      %s22 = sphi 0, %s26
      %p23 = scmp.ge.s32.totalorder %s22, 4
      %s32 = sphi 0, %s34
      %s35 = sphi 0, %s32
      %s36 = sphi 0, %s35
      %s52 = sphi 0, %s36
      %s58 = sphi 0, %s60
      %s61 = sphi 0, %s58
      %s62 = sphi 0, %s61
      %s78 = sphi 0, %s62
      %s82 = sphi 0, %s82
      %s84 = sphi 0, %s82
      %s85 = sphi 0, %s84
      %s99 = sphi 0, %s85
      %s103 = sphi 0, %s103
      %s105 = sphi 0, %s103
      %s106 = sphi 0, %s105
      %s120 = sphi 0, %s106
      %s124 = sphi 0, %s124
      %s126 = sphi 0, %s124
      %s127 = sphi 0, %s126
      %s141 = sphi 0, %s127
      %s145 = sphi 0, %s145
      %s147 = sphi 0, %s145
      %s148 = sphi 0, %s147
      %s162 = sphi 0, %s148
      %s166 = sphi 0, %s166
      %s168 = sphi 0, %s166
      %s169 = sphi 0, %s168
      %s183 = sphi 0, %s169
      %s187 = sphi 0, %s187
      %s189 = sphi 0, %s187
      %s190 = sphi 0, %s189
      %s204 = sphi 0, %s190
      %s210 = sphi 0, %s212
      %s213 = sphi 0, %s210
      %s214 = sphi 0, %s213
      %s230 = sphi 0, %s214
      %s236 = sphi 0, %s238
      %s239 = sphi 0, %s236
      %s240 = sphi 0, %s239
      %s256 = sphi 0, %s240
    $region4: #{tpu_custom_call.1} parent=1 // loop_header_branch
      %25 = sbr.rel (%p23) target = $region8
    $region5: #{tpu_custom_call.1} parent=1 // loop_body
      %s27 = ssub.s32 %s22, 1
      %s28 = ssub.s32 %s22, 2
      %s29 = sadd.s32 %s22, 1
      %s30 = ssub.s32 %s22, %s29
      %p31 = scmp.eq.s32.totalorder %s30, 0
      %s33 = sadd.s32 %s32, 1
      %s34 = scalar_select %p31, %s32, %s33
      %p37 = pneg %p31
      %p38 = scmp.eq.s32.totalorder %s22, 1
      %p39 = por %p37, %p38
      %p40 = scmp.ne.s32.totalorder %s32, %s35
      %p41 = scmp.eq.s32.totalorder %s22, 0
      %p42 = por %p40, %p41
      %p43 = scmp.ne.s32.totalorder %s32, %s35
      %p44 = scmp.eq.s32.totalorder %s27, 1
      %p45 = por %p43, %p44
      %p46 = scmp.ne.s32.totalorder %s35, %s36
      %p47 = scmp.eq.s32.totalorder %s27, 0
      %p48 = por %p46, %p47
      %p49 = scmp.ne.s32.totalorder %s35, %s36
      %p50 = scmp.eq.s32.totalorder %s28, 1
      %p51 = por %p49, %p50
      %p53 = scmp.ne.s32.totalorder %s36, %s52
      %p54 = scmp.eq.s32.totalorder %s28, 0
      %p55 = por %p53, %p54
      %s56 = ssub.s32 %s22, %s29
      %p57 = scmp.eq.s32.totalorder %s56, 0
      %s59 = sadd.s32 %s58, 1
      %s60 = scalar_select %p57, %s58, %s59
      %p63 = pneg %p57
      %p64 = scmp.eq.s32.totalorder %s22, 1
      %p65 = por %p63, %p64
      %p66 = scmp.ne.s32.totalorder %s58, %s61
      %p67 = scmp.eq.s32.totalorder %s22, 0
      %p68 = por %p66, %p67
      %p69 = scmp.ne.s32.totalorder %s58, %s61
      %p70 = scmp.eq.s32.totalorder %s27, 1
      %p71 = por %p69, %p70
      %p72 = scmp.ne.s32.totalorder %s61, %s62
      %p73 = scmp.eq.s32.totalorder %s27, 0
      %p74 = por %p72, %p73
      %p75 = scmp.ne.s32.totalorder %s61, %s62
      %p76 = scmp.eq.s32.totalorder %s28, 1
      %p77 = por %p75, %p76
      %p79 = scmp.ne.s32.totalorder %s62, %s78
      %p80 = scmp.eq.s32.totalorder %s28, 0
      %p81 = por %p79, %p80
      %s83 = sadd.s32 %s82, 1
      %p86 = scmp.eq.s32.totalorder %s22, 1
      %p87 = scmp.ne.s32.totalorder %s82, %s84
      %p88 = scmp.eq.s32.totalorder %s22, 0
      %p89 = por %p87, %p88
      %p90 = scmp.ne.s32.totalorder %s82, %s84
      %p91 = scmp.eq.s32.totalorder %s27, 1
      %p92 = por %p90, %p91
      %p93 = scmp.ne.s32.totalorder %s84, %s85
      %p94 = scmp.eq.s32.totalorder %s27, 0
      %p95 = por %p93, %p94
      %p96 = scmp.ne.s32.totalorder %s84, %s85
      %p97 = scmp.eq.s32.totalorder %s28, 1
      %p98 = por %p96, %p97
      %p100 = scmp.ne.s32.totalorder %s85, %s99
      %p101 = scmp.eq.s32.totalorder %s28, 0
      %p102 = por %p100, %p101
      %s104 = sadd.s32 %s103, 1
      %p107 = scmp.eq.s32.totalorder %s22, 1
      %p108 = scmp.ne.s32.totalorder %s103, %s105
      %p109 = scmp.eq.s32.totalorder %s22, 0
      %p110 = por %p108, %p109
      %p111 = scmp.ne.s32.totalorder %s103, %s105
      %p112 = scmp.eq.s32.totalorder %s27, 1
      %p113 = por %p111, %p112
      %p114 = scmp.ne.s32.totalorder %s105, %s106
      %p115 = scmp.eq.s32.totalorder %s27, 0
      %p116 = por %p114, %p115
      %p117 = scmp.ne.s32.totalorder %s105, %s106
      %p118 = scmp.eq.s32.totalorder %s28, 1
      %p119 = por %p117, %p118
      %p121 = scmp.ne.s32.totalorder %s106, %s120
      %p122 = scmp.eq.s32.totalorder %s28, 0
      %p123 = por %p121, %p122
      %s125 = sadd.s32 %s124, 1
      %p128 = scmp.eq.s32.totalorder %s22, 1
      %p129 = scmp.ne.s32.totalorder %s124, %s126
      %p130 = scmp.eq.s32.totalorder %s22, 0
      %p131 = por %p129, %p130
      %p132 = scmp.ne.s32.totalorder %s124, %s126
      %p133 = scmp.eq.s32.totalorder %s27, 1
      %p134 = por %p132, %p133
      %p135 = scmp.ne.s32.totalorder %s126, %s127
      %p136 = scmp.eq.s32.totalorder %s27, 0
      %p137 = por %p135, %p136
      %p138 = scmp.ne.s32.totalorder %s126, %s127
      %p139 = scmp.eq.s32.totalorder %s28, 1
      %p140 = por %p138, %p139
      %p142 = scmp.ne.s32.totalorder %s127, %s141
      %p143 = scmp.eq.s32.totalorder %s28, 0
      %p144 = por %p142, %p143
      %s146 = sadd.s32 %s145, 1
      %p149 = scmp.eq.s32.totalorder %s22, 1
      %p150 = scmp.ne.s32.totalorder %s145, %s147
      %p151 = scmp.eq.s32.totalorder %s22, 0
      %p152 = por %p150, %p151
      %p153 = scmp.ne.s32.totalorder %s145, %s147
      %p154 = scmp.eq.s32.totalorder %s27, 1
      %p155 = por %p153, %p154
      %p156 = scmp.ne.s32.totalorder %s147, %s148
      %p157 = scmp.eq.s32.totalorder %s27, 0
      %p158 = por %p156, %p157
      %p159 = scmp.ne.s32.totalorder %s147, %s148
      %p160 = scmp.eq.s32.totalorder %s28, 1
      %p161 = por %p159, %p160
      %p163 = scmp.ne.s32.totalorder %s148, %s162
      %p164 = scmp.eq.s32.totalorder %s28, 0
      %p165 = por %p163, %p164
      %s167 = sadd.s32 %s166, 1
      %p170 = scmp.eq.s32.totalorder %s22, 1
      %p171 = scmp.ne.s32.totalorder %s166, %s168
      %p172 = scmp.eq.s32.totalorder %s22, 0
      %p173 = por %p171, %p172
      %p174 = scmp.ne.s32.totalorder %s166, %s168
      %p175 = scmp.eq.s32.totalorder %s27, 1
      %p176 = por %p174, %p175
      %p177 = scmp.ne.s32.totalorder %s168, %s169
      %p178 = scmp.eq.s32.totalorder %s27, 0
      %p179 = por %p177, %p178
      %p180 = scmp.ne.s32.totalorder %s168, %s169
      %p181 = scmp.eq.s32.totalorder %s28, 1
      %p182 = por %p180, %p181
      %p184 = scmp.ne.s32.totalorder %s169, %s183
      %p185 = scmp.eq.s32.totalorder %s28, 0
      %p186 = por %p184, %p185
      %s188 = sadd.s32 %s187, 1
      %p191 = scmp.eq.s32.totalorder %s22, 1
      %p192 = scmp.ne.s32.totalorder %s187, %s189
      %p193 = scmp.eq.s32.totalorder %s22, 0
      %p194 = por %p192, %p193
      %p195 = scmp.ne.s32.totalorder %s187, %s189
      %p196 = scmp.eq.s32.totalorder %s27, 1
      %p197 = por %p195, %p196
      %p198 = scmp.ne.s32.totalorder %s189, %s190
      %p199 = scmp.eq.s32.totalorder %s27, 0
      %p200 = por %p198, %p199
      %p201 = scmp.ne.s32.totalorder %s189, %s190
      %p202 = scmp.eq.s32.totalorder %s28, 1
      %p203 = por %p201, %p202
      %p205 = scmp.ne.s32.totalorder %s190, %s204
      %p206 = scmp.eq.s32.totalorder %s28, 0
      %p207 = por %p205, %p206
      %s208 = ssub.s32 %s22, %s29
      %p209 = scmp.eq.s32.totalorder %s208, 0
      %s211 = sadd.s32 %s210, 1
      %s212 = scalar_select %p209, %s210, %s211
      %p215 = pneg %p209
      %p216 = scmp.eq.s32.totalorder %s22, 1
      %p217 = por %p215, %p216
      %p218 = scmp.ne.s32.totalorder %s210, %s213
      %p219 = scmp.eq.s32.totalorder %s22, 0
      %p220 = por %p218, %p219
      %p221 = scmp.ne.s32.totalorder %s210, %s213
      %p222 = scmp.eq.s32.totalorder %s27, 1
      %p223 = por %p221, %p222
      %p224 = scmp.ne.s32.totalorder %s213, %s214
      %p225 = scmp.eq.s32.totalorder %s27, 0
      %p226 = por %p224, %p225
      %p227 = scmp.ne.s32.totalorder %s213, %s214
      %p228 = scmp.eq.s32.totalorder %s28, 1
      %p229 = por %p227, %p228
      %p231 = scmp.ne.s32.totalorder %s214, %s230
      %p232 = scmp.eq.s32.totalorder %s28, 0
      %p233 = por %p231, %p232
      %s234 = ssub.s32 %s22, %s29
      %p235 = scmp.eq.s32.totalorder %s234, 0
      %s237 = sadd.s32 %s236, 1
      %s238 = scalar_select %p235, %s236, %s237
      %p241 = pneg %p235
      %p242 = scmp.eq.s32.totalorder %s22, 1
      %p243 = por %p241, %p242
      %p244 = scmp.ne.s32.totalorder %s236, %s239
      %p245 = scmp.eq.s32.totalorder %s22, 0
      %p246 = por %p244, %p245
      %p247 = scmp.ne.s32.totalorder %s236, %s239
      %p248 = scmp.eq.s32.totalorder %s27, 1
      %p249 = por %p247, %p248
      %p250 = scmp.ne.s32.totalorder %s239, %s240
      %p251 = scmp.eq.s32.totalorder %s27, 0
      %p252 = por %p250, %p251
      %p253 = scmp.ne.s32.totalorder %s239, %s240
      %p254 = scmp.eq.s32.totalorder %s28, 1
      %p255 = por %p253, %p254
      %p257 = scmp.ne.s32.totalorder %s240, %s256
      %p258 = scmp.eq.s32.totalorder %s28, 0
      %p259 = por %p257, %p258
      %p260 = scmp.le.s32.totalorder 1, %s22
      %p261 = scmp.lt.s32.totalorder %s22, 3
      %p262 = pnand %p260, %p261
      %p263 = pneg %p262
      // Predicated region
      $region9: #{tpu_custom_call.1} parent=5 // pred_check
        _
      $region10: #{tpu_custom_call.1} parent=5 // pred_check_branch
        %265 = sbr.rel (%p262) target = $region12
      $region11: #{tpu_custom_call.1} parent=5 // pred_region
        %s266 = ssub.s32 %s22, 1
        // Predicated region
        $region13: #{tpu_custom_call.1} parent=11 // pred_check
          %p267 = pneg %p95
        $region14: #{tpu_custom_call.1} parent=11 // pred_check_branch
          %269 = sbr.rel (%p267) target = $region16
        $region15: #{tpu_custom_call.1} parent=11 // pred_region
          _
        $region16: #{tpu_custom_call.1} parent=11 // pred_fallthru
          _
        // Predicated region
        $region17: #{tpu_custom_call.1} parent=11 // pred_check
          %p270 = pneg %p116
        $region18: #{tpu_custom_call.1} parent=11 // pred_check_branch
          %272 = sbr.rel (%p270) target = $region20
        $region19: #{tpu_custom_call.1} parent=11 // pred_region
          _
        $region20: #{tpu_custom_call.1} parent=11 // pred_fallthru
          _
        // Predicated region
        $region21: #{tpu_custom_call.1} parent=11 // pred_check
          %p273 = pneg %p137
        $region22: #{tpu_custom_call.1} parent=11 // pred_check_branch
          %275 = sbr.rel (%p273) target = $region24
        $region23: #{tpu_custom_call.1} parent=11 // pred_region
          _
        $region24: #{tpu_custom_call.1} parent=11 // pred_fallthru
          _
        // Predicated region
        $region25: #{tpu_custom_call.1} parent=11 // pred_check
          %p276 = pneg %p158
        $region26: #{tpu_custom_call.1} parent=11 // pred_check_branch
          %278 = sbr.rel (%p276) target = $region28
        $region27: #{tpu_custom_call.1} parent=11 // pred_region
          _
        $region28: #{tpu_custom_call.1} parent=11 // pred_fallthru
          _
        // Predicated region
        $region29: #{tpu_custom_call.1} parent=11 // pred_check
          %p279 = pneg %p179
        $region30: #{tpu_custom_call.1} parent=11 // pred_check_branch
          %281 = sbr.rel (%p279) target = $region32
        $region31: #{tpu_custom_call.1} parent=11 // pred_region
          _
        $region32: #{tpu_custom_call.1} parent=11 // pred_fallthru
          _
        // Predicated region
        $region33: #{tpu_custom_call.1} parent=11 // pred_check
          %p282 = pneg %p200
        $region34: #{tpu_custom_call.1} parent=11 // pred_check_branch
          %284 = sbr.rel (%p282) target = $region36
        $region35: #{tpu_custom_call.1} parent=11 // pred_region
          _
        $region36: #{tpu_custom_call.1} parent=11 // pred_fallthru
          _
      $region12: #{tpu_custom_call.1} parent=5 // pred_fallthru
        _
      %p285 = scmp.lt.s32.totalorder %s22, 2
      // Predicated region
      $region37: #{tpu_custom_call.1} parent=5 // pred_check
        %p286 = pneg %p285
      $region38: #{tpu_custom_call.1} parent=5 // pred_check_branch
        %288 = sbr.rel (%p286) target = $region40
      $region39: #{tpu_custom_call.1} parent=5 // pred_region
        // Predicated region
        $region41: #{tpu_custom_call.1} parent=39 // pred_check
          %p289 = pneg %p42
        $region42: #{tpu_custom_call.1} parent=39 // pred_check_branch
          %291 = sbr.rel (%p289) target = $region44
        $region43: #{tpu_custom_call.1} parent=39 // pred_region
          %s292 = smul.u32 2, %s22
          %p293 = scmp.lt.s32.totalorder %s292, 3
          %s294 = scalar_select %p293, %s292, 3
          %s295 = smul.addr %s294, 8
          %s296 = scalar_lea.vmem %s0, %s295
          %s297 = smul.u32 2, %s22
        $region44: #{tpu_custom_call.1} parent=39 // pred_fallthru
          _
        // Predicated region
        $region45: #{tpu_custom_call.1} parent=39 // pred_check
          %p298 = pneg %p68
        $region46: #{tpu_custom_call.1} parent=39 // pred_check_branch
          %300 = sbr.rel (%p298) target = $region48
        $region47: #{tpu_custom_call.1} parent=39 // pred_region
          %s301 = smul.u32 2, %s22
          %p302 = scmp.lt.s32.totalorder %s301, 3
          %s303 = scalar_select %p302, %s301, 3
          %s304 = smul.addr %s303, 8
          %s305 = scalar_lea.vmem %s1, %s304
          %s306 = smul.u32 2, %s22
        $region48: #{tpu_custom_call.1} parent=39 // pred_fallthru
          _
      $region40: #{tpu_custom_call.1} parent=5 // pred_fallthru
        _
      %p307 = scmp.le.s32.totalorder 1, %s22
      %p308 = scmp.lt.s32.totalorder %s22, 3
      %p309 = pnand %p307, %p308
      %p310 = pneg %p309
      // Predicated region
      $region49: #{tpu_custom_call.1} parent=5 // pred_check
        _
      $region50: #{tpu_custom_call.1} parent=5 // pred_check_branch
        %312 = sbr.rel (%p309) target = $region52
      $region51: #{tpu_custom_call.1} parent=5 // pred_region
        %s313 = ssub.s32 %s22, 1
        %s314 = smul.u32 2, %s27
        %p315 = scmp.lt.s32.totalorder %s314, 3
        %s316 = scalar_select %p315, %s314, 3
        %s317 = smul.addr %s316, 8
        %s318 = scalar_lea.vmem %s0, %s317
        %p319 = pneg %p48
        %p320 = pneg %p45
        %s321 = smul.u32 2, %s27
        %p322 = scmp.lt.s32.totalorder %s321, 3
        %s323 = scalar_select %p322, %s321, 3
        %s324 = smul.addr %s323, 8
        %s325 = scalar_lea.vmem %s1, %s324
        %p326 = pneg %p74
        %p327 = pneg %p71
        %p328 = pneg %p95
        %p329 = pneg %p92
        %p330 = pneg %p116
        %p331 = pneg %p113
        %p332 = pneg %p137
        %p333 = pneg %p134
        %p334 = pneg %p158
        %p335 = pneg %p155
        %p336 = pneg %p179
        %p337 = pneg %p176
        %p338 = pneg %p200
        %p339 = pneg %p197
        %p340 = pneg %p226
        %p341 = pneg %p223
        %s342 = sand.u32 %s213, 1
        %s343 = scalar_lea.sflag [#allocation3], %s342
        %s344 = sand.u32 %s213, 1
        %s345 = smul.addr %s344, 64
        %s346 = scalar_lea.vmem [#allocation2], %s345
        %p347 = pneg %p252
        %p348 = pneg %p249
        %s349 = sand.u32 %s239, 1
        %s350 = scalar_lea.sflag [#allocation5], %s349
        %s351 = sand.u32 %s239, 1
        %s352 = smul.addr %s351, 64
        %s353 = scalar_lea.vmem [#allocation4], %s352
        %s354 = smul.u32 2, %s27
        %p355 = scmp.lt.s32.totalorder %s354, 3
        %s356 = scalar_select %p355, %s354, 3
        %s357 = smul.addr %s356, 8
        %s358 = scalar_lea.vmem %s0, %s357
        %s359 = smul.u32 2, %s27
        %s360 = smul.u32 2, %s27
        %p361 = scmp.lt.s32.totalorder %s360, 3
        %s362 = scalar_select %p361, %s360, 3
        %s363 = smul.addr %s362, 8
        %s364 = scalar_lea.vmem %s1, %s363
        %s365 = smul.u32 2, %s27
        %s366 = smul.u32 2, %s27
        %s367 = smul.u32 2, %s27
        %v368 = vld [vmem:[%s358] sm:$0xff]
        %v369 = vld [vmem:[%s358 + $0x8] sm:$0xff]
        %v370 = vld [vmem:[%s364] sm:$0xff]
        %v371 = vld [vmem:[%s364 + $0x8] sm:$0xff]
        %v372 = vld [vmem:[%s2] sm:$0xff]
        %v373 = vld [vmem:[%s2 + $0x8] sm:$0xff]
        %v374 = vld [vmem:[%s2 + $0x10] sm:$0xff]
        %v375 = vld [vmem:[%s2 + $0x18] sm:$0xff]
        %v376 = vld [vmem:[%s3] sm:$0x1]
        %v378 = vlaneseq
        %v379 = vshrl.u32 %v378, 7
        %v380 = vsub.s32 0, %v379
        %v381 = vrot.slane %v376, %v380
        %vm383 = vcmask 261120
        %v385 = vsel %vm383, %v368, 0
        %v388 = vsel %vm383, %v369, 0
        %390 = vmatprep.subr.mxu0 0.0
        %391 = vmatpush1.msra.mxu0 0.0
        %392 = vmatprep.subr.mxu0 0.0
        %393 = vmatpush1.msra.mxu0 0.0
        %394 = vmatprep.subr.mxu0 0.0
        %395 = vmatpush1.msra.mxu0 0.0
        %396 = vmatprep.subr.mxu0 0.0
        %397 = vmatpush1.msra.mxu0 0.0
        %398 = vmatprep.subr.mxu0 0.0
        %399 = vmatpush1.msra.mxu0 0.0
        %400 = vmatprep.subr.mxu0 0.0
        %401 = vmatpush1.msra.mxu0 0.0
        %402 = vmatprep.subr.mxu0 0.0
        %403 = vmatpush1.msra.mxu0 0.0
        %404 = vmatprep.subr.mxu0 0.0
        %405 = vmatpush1.msra.mxu0 0.0
        %406 = vmatprep.subr.mxu0 0.0
        %407 = vmatpush1.msra.mxu0 0.0
        %408 = vmatprep.subr.mxu0 0.0
        %409 = vmatpush1.msra.mxu0 0.0
        %410 = vmatprep.subr.mxu0 0.0
        %411 = vmatpush1.msra.mxu0 0.0
        %412 = vmatprep.subr.mxu0 0.0
        %413 = vmatpush1.msra.mxu0 0.0
        %414 = vmatprep.subr.mxu0 0.0
        %415 = vmatpush1.msra.mxu0 %v375
        %416 = vmatprep.subr.mxu0 0.0
        %417 = vmatpush1.msra.mxu0 %v374
        %418 = vmatprep.subr.mxu0 0.0
        %419 = vmatpush1.msra.mxu0 %v373
        %420 = vmatprep.subr.mxu0 0.0
        %421 = vmatpush1.msra.mxu0 %v372
        %422 = vmatprep.subr.mxu0 0.0
        %423 = vmatpush2.msra.mxu0 0.0
        %424 = vmatprep.subr.mxu0 0.0
        %425 = vmatpush2.msra.mxu0 0.0
        %426 = vmatprep.subr.mxu0 0.0
        %427 = vmatpush2.msra.mxu0 0.0
        %428 = vmatprep.subr.mxu0 0.0
        %429 = vmatpush2.msra.mxu0 0.0
        %430 = vmatprep.subr.mxu0 0.0
        %431 = vmatpush2.msra.mxu0 0.0
        %432 = vmatprep.subr.mxu0 0.0
        %433 = vmatpush2.msra.mxu0 0.0
        %434 = vmatprep.subr.mxu0 0.0
        %435 = vmatpush2.msra.mxu0 0.0
        %436 = vmatprep.subr.mxu0 0.0
        %437 = vmatpush2.msra.mxu0 0.0
        %438 = vmatprep.subr.mxu0 0.0
        %439 = vmatpush2.msra.mxu0 0.0
        %440 = vmatprep.subr.mxu0 0.0
        %441 = vmatpush2.msra.mxu0 0.0
        %442 = vmatprep.subr.mxu0 0.0
        %443 = vmatpush2.msra.mxu0 0.0
        %444 = vmatprep.subr.mxu0 0.0
        %445 = vmatpush2.msra.mxu0 0.0
        %446 = vmatprep.subr.mxu0 0.0
        %447 = vmatpush2.msra.mxu0 0.0
        %448 = vmatprep.subr.mxu0 0.0
        %449 = vmatpush2.msra.mxu0 0.0
        %450 = vmatprep.subr.mxu0 0.0
        %451 = vmatpush2.msra.mxu0 0.0
        %452 = vmatprep.subr.mxu0 0.0
        %453 = vmatpush2.msra.mxu0 0.0
        %454 = vmatprep.mubr.f32.mxu0 0.0
        %455 = vmatmul.mubr.f32.gmra.mxu0 %v385
        %v456 = vpop.f32.mrf.mxu0
        %v457 = vadd.f32 %v381, %v456
        %v458 = vpop.f32.mrf.mxu0
        %459 = vmatprep.mubr.f32.mxu0 0.0
        %460 = vmatmul.mubr.f32.gmra.mxu0 %v388
        %v461 = vpop.f32.mrf.mxu0
        %v462 = vadd.f32 %v381, %v461
        %v463 = vpop.f32.mrf.mxu0
        %464 = vdwg.mxu0
        %v465 = vmax.f32 %v457, 0.0
        %v466 = vmax.f32 %v462, 0.0
        %v467 = vld [vmem:[%s4] sm:$0xff]
        %v468 = vld [vmem:[%s4 + $0x8] sm:$0xff]
        %v469 = vld [vmem:[%s4 + $0x10] sm:$0xff]
        %v470 = vld [vmem:[%s4 + $0x18] sm:$0xff]
        %v471 = vld [vmem:[%s5] sm:$0x1]
        %v473 = vlaneseq
        %v474 = vshrl.u32 %v473, 7
        %v475 = vsub.s32 0, %v474
        %v476 = vrot.slane %v471, %v475
        %v479 = vsel %vm383, %v370, 0
        %v482 = vsel %vm383, %v371, 0
        %484 = vmatprep.subr.mxu0 0.0
        %485 = vmatpush1.msra.mxu0 0.0
        %486 = vmatprep.subr.mxu0 0.0
        %487 = vmatpush1.msra.mxu0 0.0
        %488 = vmatprep.subr.mxu0 0.0
        %489 = vmatpush1.msra.mxu0 0.0
        %490 = vmatprep.subr.mxu0 0.0
        %491 = vmatpush1.msra.mxu0 0.0
        %492 = vmatprep.subr.mxu0 0.0
        %493 = vmatpush1.msra.mxu0 0.0
        %494 = vmatprep.subr.mxu0 0.0
        %495 = vmatpush1.msra.mxu0 0.0
        %496 = vmatprep.subr.mxu0 0.0
        %497 = vmatpush1.msra.mxu0 0.0
        %498 = vmatprep.subr.mxu0 0.0
        %499 = vmatpush1.msra.mxu0 0.0
        %500 = vmatprep.subr.mxu0 0.0
        %501 = vmatpush1.msra.mxu0 0.0
        %502 = vmatprep.subr.mxu0 0.0
        %503 = vmatpush1.msra.mxu0 0.0
        %504 = vmatprep.subr.mxu0 0.0
        %505 = vmatpush1.msra.mxu0 0.0
        %506 = vmatprep.subr.mxu0 0.0
        %507 = vmatpush1.msra.mxu0 0.0
        %508 = vmatprep.subr.mxu0 0.0
        %509 = vmatpush1.msra.mxu0 %v470
        %510 = vmatprep.subr.mxu0 0.0
        %511 = vmatpush1.msra.mxu0 %v469
        %512 = vmatprep.subr.mxu0 0.0
        %513 = vmatpush1.msra.mxu0 %v468
        %514 = vmatprep.subr.mxu0 0.0
        %515 = vmatpush1.msra.mxu0 %v467
        %516 = vmatprep.subr.mxu0 0.0
        %517 = vmatpush2.msra.mxu0 0.0
        %518 = vmatprep.subr.mxu0 0.0
        %519 = vmatpush2.msra.mxu0 0.0
        %520 = vmatprep.subr.mxu0 0.0
        %521 = vmatpush2.msra.mxu0 0.0
        %522 = vmatprep.subr.mxu0 0.0
        %523 = vmatpush2.msra.mxu0 0.0
        %524 = vmatprep.subr.mxu0 0.0
        %525 = vmatpush2.msra.mxu0 0.0
        %526 = vmatprep.subr.mxu0 0.0
        %527 = vmatpush2.msra.mxu0 0.0
        %528 = vmatprep.subr.mxu0 0.0
        %529 = vmatpush2.msra.mxu0 0.0
        %530 = vmatprep.subr.mxu0 0.0
        %531 = vmatpush2.msra.mxu0 0.0
        %532 = vmatprep.subr.mxu0 0.0
        %533 = vmatpush2.msra.mxu0 0.0
        %534 = vmatprep.subr.mxu0 0.0
        %535 = vmatpush2.msra.mxu0 0.0
        %536 = vmatprep.subr.mxu0 0.0
        %537 = vmatpush2.msra.mxu0 0.0
        %538 = vmatprep.subr.mxu0 0.0
        %539 = vmatpush2.msra.mxu0 0.0
        %540 = vmatprep.subr.mxu0 0.0
        %541 = vmatpush2.msra.mxu0 0.0
        %542 = vmatprep.subr.mxu0 0.0
        %543 = vmatpush2.msra.mxu0 0.0
        %544 = vmatprep.subr.mxu0 0.0
        %545 = vmatpush2.msra.mxu0 0.0
        %546 = vmatprep.subr.mxu0 0.0
        %547 = vmatpush2.msra.mxu0 0.0
        %548 = vmatprep.mubr.f32.mxu0 0.0
        %549 = vmatmul.mubr.f32.gmra.mxu0 %v479
        %v550 = vpop.f32.mrf.mxu0
        %v551 = vadd.f32 %v476, %v550
        %v552 = vpop.f32.mrf.mxu0
        %553 = vmatprep.mubr.f32.mxu0 0.0
        %554 = vmatmul.mubr.f32.gmra.mxu0 %v482
        %v555 = vpop.f32.mrf.mxu0
        %v556 = vadd.f32 %v476, %v555
        %v557 = vpop.f32.mrf.mxu0
        %558 = vdwg.mxu0
        %v559 = vmax.f32 %v551, 0.0
        %v560 = vmax.f32 %v556, 0.0
        %561 = vxpose.xlu0.b32.start [1/16] %v559, 128
        %562 = vxpose.xlu0.b32.cont [2/16] %v560, 128
        %563 = vxpose.xlu0.b32.cont [3/16] 0.0, 128
        %564 = vxpose.xlu0.b32.cont [4/16] 0.0, 128
        %565 = vxpose.xlu0.b32.cont [5/16] 0.0, 128
        %566 = vxpose.xlu0.b32.cont [6/16] 0.0, 128
        %567 = vxpose.xlu0.b32.cont [7/16] 0.0, 128
        %568 = vxpose.xlu0.b32.cont [8/16] 0.0, 128
        %569 = vxpose.xlu0.b32.cont [9/16] 0.0, 128
        %570 = vxpose.xlu0.b32.cont [10/16] 0.0, 128
        %571 = vxpose.xlu0.b32.cont [11/16] 0.0, 128
        %572 = vxpose.xlu0.b32.cont [12/16] 0.0, 128
        %573 = vxpose.xlu0.b32.cont [13/16] 0.0, 128
        %574 = vxpose.xlu0.b32.cont [14/16] 0.0, 128
        %575 = vxpose.xlu0.b32.cont [15/16] 0.0, 128
        %576 = vxpose.xlu0.b32.end [16/16] 0.0, 128
        %v577 = vpop.trf.xlu0
        %v578 = vpop.trf.xlu0
        %v579 = vpop.trf.xlu0
        %v580 = vpop.trf.xlu0
        %v581 = vpop.trf.xlu0
        %v582 = vpop.trf.xlu0
        %v583 = vpop.trf.xlu0
        %v584 = vpop.trf.xlu0
        %v585 = vpop.trf.xlu0
        %v586 = vpop.trf.xlu0
        %v587 = vpop.trf.xlu0
        %v588 = vpop.trf.xlu0
        %v589 = vpop.trf.xlu0
        %v590 = vpop.trf.xlu0
        %v591 = vpop.trf.xlu0
        %v592 = vpop.trf.xlu0
        %v593 = vld [vmem:[%s6] sm:$0xff]
        %v594 = vld [vmem:[%s6 + $0x8] sm:$0xff]
        %v595 = vld [vmem:[%s6 + $0x10] sm:$0xff]
        %v596 = vld [vmem:[%s6 + $0x18] sm:$0xff]
        %v597 = vld [vmem:[%s6 + $0x20] sm:$0xff]
        %v598 = vld [vmem:[%s6 + $0x28] sm:$0xff]
        %v599 = vld [vmem:[%s6 + $0x30] sm:$0xff]
        %v600 = vld [vmem:[%s6 + $0x38] sm:$0xff]
        %v601 = vld [vmem:[%s6 + $0x40] sm:$0xff]
        %v602 = vld [vmem:[%s6 + $0x48] sm:$0xff]
        %v603 = vld [vmem:[%s6 + $0x50] sm:$0xff]
        %v604 = vld [vmem:[%s6 + $0x58] sm:$0xff]
        %v605 = vld [vmem:[%s6 + $0x60] sm:$0xff]
        %v606 = vld [vmem:[%s6 + $0x68] sm:$0xff]
        %v607 = vld [vmem:[%s6 + $0x70] sm:$0xff]
        %v608 = vld [vmem:[%s6 + $0x78] sm:$0xff]
        %610 = vset.pattern.permute.xlu0 0
        %611 = vperm.xlu0 %610, %v593
        %v612 = vpop.permute.xlu0 %611
        %615 = vset.pattern.permute.xlu0 0
        %616 = vperm.xlu0 %615, %v594
        %v617 = vpop.permute.xlu0 %616
        %620 = vset.pattern.permute.xlu0 0
        %621 = vperm.xlu0 %620, %v595
        %v622 = vpop.permute.xlu0 %621
        %625 = vset.pattern.permute.xlu0 0
        %626 = vperm.xlu0 %625, %v596
        %v627 = vpop.permute.xlu0 %626
        %630 = vset.pattern.permute.xlu0 0
        %631 = vperm.xlu0 %630, %v597
        %v632 = vpop.permute.xlu0 %631
        %635 = vset.pattern.permute.xlu0 0
        %636 = vperm.xlu0 %635, %v598
        %v637 = vpop.permute.xlu0 %636
        %640 = vset.pattern.permute.xlu0 0
        %641 = vperm.xlu0 %640, %v599
        %v642 = vpop.permute.xlu0 %641
        %645 = vset.pattern.permute.xlu0 0
        %646 = vperm.xlu0 %645, %v600
        %v647 = vpop.permute.xlu0 %646
        %650 = vset.pattern.permute.xlu0 0
        %651 = vperm.xlu0 %650, %v601
        %v652 = vpop.permute.xlu0 %651
        %655 = vset.pattern.permute.xlu0 0
        %656 = vperm.xlu0 %655, %v602
        %v657 = vpop.permute.xlu0 %656
        %660 = vset.pattern.permute.xlu0 0
        %661 = vperm.xlu0 %660, %v603
        %v662 = vpop.permute.xlu0 %661
        %665 = vset.pattern.permute.xlu0 0
        %666 = vperm.xlu0 %665, %v604
        %v667 = vpop.permute.xlu0 %666
        %670 = vset.pattern.permute.xlu0 0
        %671 = vperm.xlu0 %670, %v605
        %v672 = vpop.permute.xlu0 %671
        %675 = vset.pattern.permute.xlu0 0
        %676 = vperm.xlu0 %675, %v606
        %v677 = vpop.permute.xlu0 %676
        %680 = vset.pattern.permute.xlu0 0
        %681 = vperm.xlu0 %680, %v607
        %v682 = vpop.permute.xlu0 %681
        %685 = vset.pattern.permute.xlu0 0
        %686 = vperm.xlu0 %685, %v608
        %v687 = vpop.permute.xlu0 %686
        %689 = vset.pattern.permute.xlu0 1
        %690 = vperm.xlu0 %689, %v593
        %v691 = vpop.permute.xlu0 %690
        %693 = vset.pattern.permute.xlu0 1
        %694 = vperm.xlu0 %693, %v594
        %v695 = vpop.permute.xlu0 %694
        %697 = vset.pattern.permute.xlu0 1
        %698 = vperm.xlu0 %697, %v595
        %v699 = vpop.permute.xlu0 %698
        %701 = vset.pattern.permute.xlu0 1
        %702 = vperm.xlu0 %701, %v596
        %v703 = vpop.permute.xlu0 %702
        %705 = vset.pattern.permute.xlu0 1
        %706 = vperm.xlu0 %705, %v597
        %v707 = vpop.permute.xlu0 %706
        %709 = vset.pattern.permute.xlu0 1
        %710 = vperm.xlu0 %709, %v598
        %v711 = vpop.permute.xlu0 %710
        %713 = vset.pattern.permute.xlu0 1
        %714 = vperm.xlu0 %713, %v599
        %v715 = vpop.permute.xlu0 %714
        %717 = vset.pattern.permute.xlu0 1
        %718 = vperm.xlu0 %717, %v600
        %v719 = vpop.permute.xlu0 %718
        %721 = vset.pattern.permute.xlu0 1
        %722 = vperm.xlu0 %721, %v601
        %v723 = vpop.permute.xlu0 %722
        %725 = vset.pattern.permute.xlu0 1
        %726 = vperm.xlu0 %725, %v602
        %v727 = vpop.permute.xlu0 %726
        %729 = vset.pattern.permute.xlu0 1
        %730 = vperm.xlu0 %729, %v603
        %v731 = vpop.permute.xlu0 %730
        %733 = vset.pattern.permute.xlu0 1
        %734 = vperm.xlu0 %733, %v604
        %v735 = vpop.permute.xlu0 %734
        %737 = vset.pattern.permute.xlu0 1
        %738 = vperm.xlu0 %737, %v605
        %v739 = vpop.permute.xlu0 %738
        %741 = vset.pattern.permute.xlu0 1
        %742 = vperm.xlu0 %741, %v606
        %v743 = vpop.permute.xlu0 %742
        %745 = vset.pattern.permute.xlu0 1
        %746 = vperm.xlu0 %745, %v607
        %v747 = vpop.permute.xlu0 %746
        %749 = vset.pattern.permute.xlu0 1
        %750 = vperm.xlu0 %749, %v608
        %v751 = vpop.permute.xlu0 %750
        %753 = vset.pattern.permute.xlu0 2
        %754 = vperm.xlu0 %753, %v593
        %v755 = vpop.permute.xlu0 %754
        %757 = vset.pattern.permute.xlu0 2
        %758 = vperm.xlu0 %757, %v594
        %v759 = vpop.permute.xlu0 %758
        %761 = vset.pattern.permute.xlu0 2
        %762 = vperm.xlu0 %761, %v595
        %v763 = vpop.permute.xlu0 %762
        %765 = vset.pattern.permute.xlu0 2
        %766 = vperm.xlu0 %765, %v596
        %v767 = vpop.permute.xlu0 %766
        %769 = vset.pattern.permute.xlu0 2
        %770 = vperm.xlu0 %769, %v597
        %v771 = vpop.permute.xlu0 %770
        %773 = vset.pattern.permute.xlu0 2
        %774 = vperm.xlu0 %773, %v598
        %v775 = vpop.permute.xlu0 %774
        %777 = vset.pattern.permute.xlu0 2
        %778 = vperm.xlu0 %777, %v599
        %v779 = vpop.permute.xlu0 %778
        %781 = vset.pattern.permute.xlu0 2
        %782 = vperm.xlu0 %781, %v600
        %v783 = vpop.permute.xlu0 %782
        %785 = vset.pattern.permute.xlu0 2
        %786 = vperm.xlu0 %785, %v601
        %v787 = vpop.permute.xlu0 %786
        %789 = vset.pattern.permute.xlu0 2
        %790 = vperm.xlu0 %789, %v602
        %v791 = vpop.permute.xlu0 %790
        %793 = vset.pattern.permute.xlu0 2
        %794 = vperm.xlu0 %793, %v603
        %v795 = vpop.permute.xlu0 %794
        %797 = vset.pattern.permute.xlu0 2
        %798 = vperm.xlu0 %797, %v604
        %v799 = vpop.permute.xlu0 %798
        %801 = vset.pattern.permute.xlu0 2
        %802 = vperm.xlu0 %801, %v605
        %v803 = vpop.permute.xlu0 %802
        %805 = vset.pattern.permute.xlu0 2
        %806 = vperm.xlu0 %805, %v606
        %v807 = vpop.permute.xlu0 %806
        %809 = vset.pattern.permute.xlu0 2
        %810 = vperm.xlu0 %809, %v607
        %v811 = vpop.permute.xlu0 %810
        %813 = vset.pattern.permute.xlu0 2
        %814 = vperm.xlu0 %813, %v608
        %v815 = vpop.permute.xlu0 %814
        %817 = vset.pattern.permute.xlu0 3
        %818 = vperm.xlu0 %817, %v593
        %v819 = vpop.permute.xlu0 %818
        %821 = vset.pattern.permute.xlu0 3
        %822 = vperm.xlu0 %821, %v594
        %v823 = vpop.permute.xlu0 %822
        %825 = vset.pattern.permute.xlu0 3
        %826 = vperm.xlu0 %825, %v595
        %v827 = vpop.permute.xlu0 %826
        %829 = vset.pattern.permute.xlu0 3
        %830 = vperm.xlu0 %829, %v596
        %v831 = vpop.permute.xlu0 %830
        %833 = vset.pattern.permute.xlu0 3
        %834 = vperm.xlu0 %833, %v597
        %v835 = vpop.permute.xlu0 %834
        %837 = vset.pattern.permute.xlu0 3
        %838 = vperm.xlu0 %837, %v598
        %v839 = vpop.permute.xlu0 %838
        %841 = vset.pattern.permute.xlu0 3
        %842 = vperm.xlu0 %841, %v599
        %v843 = vpop.permute.xlu0 %842
        %845 = vset.pattern.permute.xlu0 3
        %846 = vperm.xlu0 %845, %v600
        %v847 = vpop.permute.xlu0 %846
        %849 = vset.pattern.permute.xlu0 3
        %850 = vperm.xlu0 %849, %v601
        %v851 = vpop.permute.xlu0 %850
        %853 = vset.pattern.permute.xlu0 3
        %854 = vperm.xlu0 %853, %v602
        %v855 = vpop.permute.xlu0 %854
        %857 = vset.pattern.permute.xlu0 3
        %858 = vperm.xlu0 %857, %v603
        %v859 = vpop.permute.xlu0 %858
        %861 = vset.pattern.permute.xlu0 3
        %862 = vperm.xlu0 %861, %v604
        %v863 = vpop.permute.xlu0 %862
        %865 = vset.pattern.permute.xlu0 3
        %866 = vperm.xlu0 %865, %v605
        %v867 = vpop.permute.xlu0 %866
        %869 = vset.pattern.permute.xlu0 3
        %870 = vperm.xlu0 %869, %v606
        %v871 = vpop.permute.xlu0 %870
        %873 = vset.pattern.permute.xlu0 3
        %874 = vperm.xlu0 %873, %v607
        %v875 = vpop.permute.xlu0 %874
        %877 = vset.pattern.permute.xlu0 3
        %878 = vperm.xlu0 %877, %v608
        %v879 = vpop.permute.xlu0 %878
        %v881 = vld [vmem:[%s7] sm:$0xf]
        %v882 = vand.u32 2147483647, %v368
        %v883 = vand.u32 2147483647, %v369
        %v884 = vsel %vm383, %v882, 0.0
        %885 = vadd.xlane.f32.xlu0 %v884
        %v886 = vpop.xlane.xlu0 %885
        %v887 = vsel %vm383, %v883, 0.0
        %888 = vadd.xlane.f32.xlu0 %v887
        %v889 = vpop.xlane.xlu0 %888
        %vm890 = vcmp.eq.f32.partialorder %v886, 0.0
        %vm891 = vcmp.eq.f32.partialorder %v889, 0.0
        %vm892 = vcmask 64512
        %v893 = vsel %vm892, %v577, 0.0
        %v894 = vsel %vm892, %v578, 0.0
        %v895 = vsel %vm892, %v579, 0.0
        %v896 = vsel %vm892, %v580, 0.0
        %v897 = vsel %vm892, %v581, 0.0
        %v898 = vsel %vm892, %v582, 0.0
        %v899 = vsel %vm892, %v583, 0.0
        %v900 = vsel %vm892, %v584, 0.0
        %v901 = vsel %vm892, %v585, 0.0
        %v902 = vsel %vm892, %v586, 0.0
        %v903 = vsel %vm892, %v587, 0.0
        %v904 = vsel %vm892, %v588, 0.0
        %v905 = vsel %vm892, %v589, 0.0
        %v906 = vsel %vm892, %v590, 0.0
        %v907 = vsel %vm892, %v591, 0.0
        %v908 = vsel %vm892, %v592, 0.0
        %v909 = vmul.f32 %v893, %v612
        %v910 = vmul.f32 %v894, %v617
        %v911 = vmul.f32 %v895, %v622
        %v912 = vmul.f32 %v896, %v627
        %v913 = vmul.f32 %v897, %v632
        %v914 = vmul.f32 %v898, %v637
        %v915 = vmul.f32 %v899, %v642
        %v916 = vmul.f32 %v900, %v647
        %v917 = vmul.f32 %v901, %v652
        %v918 = vmul.f32 %v902, %v657
        %v919 = vmul.f32 %v903, %v662
        %v920 = vmul.f32 %v904, %v667
        %v921 = vmul.f32 %v905, %v672
        %v922 = vmul.f32 %v906, %v677
        %v923 = vmul.f32 %v907, %v682
        %v924 = vmul.f32 %v908, %v687
        %v925 = vmul.f32 %v893, %v691
        %v926 = vmul.f32 %v894, %v695
        %v927 = vmul.f32 %v895, %v699
        %v928 = vmul.f32 %v896, %v703
        %v929 = vmul.f32 %v897, %v707
        %v930 = vmul.f32 %v898, %v711
        %v931 = vmul.f32 %v899, %v715
        %v932 = vmul.f32 %v900, %v719
        %v933 = vmul.f32 %v901, %v723
        %v934 = vmul.f32 %v902, %v727
        %v935 = vmul.f32 %v903, %v731
        %v936 = vmul.f32 %v904, %v735
        %v937 = vmul.f32 %v905, %v739
        %v938 = vmul.f32 %v906, %v743
        %v939 = vmul.f32 %v907, %v747
        %v940 = vmul.f32 %v908, %v751
        %v941 = vmul.f32 %v893, %v755
        %v942 = vmul.f32 %v894, %v759
        %v943 = vmul.f32 %v895, %v763
        %v944 = vmul.f32 %v896, %v767
        %v945 = vmul.f32 %v897, %v771
        %v946 = vmul.f32 %v898, %v775
        %v947 = vmul.f32 %v899, %v779
        %v948 = vmul.f32 %v900, %v783
        %v949 = vmul.f32 %v901, %v787
        %v950 = vmul.f32 %v902, %v791
        %v951 = vmul.f32 %v903, %v795
        %v952 = vmul.f32 %v904, %v799
        %v953 = vmul.f32 %v905, %v803
        %v954 = vmul.f32 %v906, %v807
        %v955 = vmul.f32 %v907, %v811
        %v956 = vmul.f32 %v908, %v815
        %v957 = vmul.f32 %v893, %v819
        %v958 = vmul.f32 %v894, %v823
        %v959 = vmul.f32 %v895, %v827
        %v960 = vmul.f32 %v896, %v831
        %v961 = vmul.f32 %v897, %v835
        %v962 = vmul.f32 %v898, %v839
        %v963 = vmul.f32 %v899, %v843
        %v964 = vmul.f32 %v900, %v847
        %v965 = vmul.f32 %v901, %v851
        %v966 = vmul.f32 %v902, %v855
        %v967 = vmul.f32 %v903, %v859
        %v968 = vmul.f32 %v904, %v863
        %v969 = vmul.f32 %v905, %v867
        %v970 = vmul.f32 %v906, %v871
        %v971 = vmul.f32 %v907, %v875
        %v972 = vmul.f32 %v908, %v879
        %v974 = vlaneseq
        %v975 = vshrl.u32 %v974, 7
        %v976 = vsub.s32 0, %v975
        %v977 = vrot.slane %v881, %v976
        %v978 = vlaneseq
        %v979 = vshrl.u32 %v978, 7
        %v980 = vsub.s32 1, %v979
        %v981 = vrot.slane %v881, %v980
        %v982 = vlaneseq
        %v983 = vshrl.u32 %v982, 7
        %v984 = vsub.s32 2, %v983
        %v985 = vrot.slane %v881, %v984
        %v986 = vlaneseq
        %v987 = vshrl.u32 %v986, 7
        %v988 = vsub.s32 3, %v987
        %v989 = vrot.slane %v881, %v988
        %994 = vmatprep.subr.mxu0 %v940
        %995 = vmatpush1.msra.mxu0 %v924
        %996 = vmatprep.subr.mxu0 %v939
        %997 = vmatpush1.msra.mxu0 %v923
        %998 = vmatprep.subr.mxu0 %v938
        %999 = vmatpush1.msra.mxu0 %v922
        %1000 = vmatprep.subr.mxu0 %v937
        %1001 = vmatpush1.msra.mxu0 %v921
        %1002 = vmatprep.subr.mxu0 %v936
        %1003 = vmatpush1.msra.mxu0 %v920
        %1004 = vmatprep.subr.mxu0 %v935
        %1005 = vmatpush1.msra.mxu0 %v919
        %1006 = vmatprep.subr.mxu0 %v934
        %1007 = vmatpush1.msra.mxu0 %v918
        %1008 = vmatprep.subr.mxu0 %v933
        %1009 = vmatpush1.msra.mxu0 %v917
        %1010 = vmatprep.subr.mxu0 %v932
        %1011 = vmatpush1.msra.mxu0 %v916
        %1012 = vmatprep.subr.mxu0 %v931
        %1013 = vmatpush1.msra.mxu0 %v915
        %1014 = vmatprep.subr.mxu0 %v930
        %1015 = vmatpush1.msra.mxu0 %v914
        %1016 = vmatprep.subr.mxu0 %v929
        %1017 = vmatpush1.msra.mxu0 %v913
        %1018 = vmatprep.subr.mxu0 %v928
        %1019 = vmatpush1.msra.mxu0 %v912
        %1020 = vmatprep.subr.mxu0 %v927
        %1021 = vmatpush1.msra.mxu0 %v911
        %1022 = vmatprep.subr.mxu0 %v926
        %1023 = vmatpush1.msra.mxu0 %v910
        %1024 = vmatprep.subr.mxu0 %v925
        %1025 = vmatpush1.msra.mxu0 %v909
        %1026 = vmatprep.subr.mxu0 0.0
        %1027 = vmatpush2.msra.mxu0 0.0
        %1028 = vmatprep.subr.mxu0 0.0
        %1029 = vmatpush2.msra.mxu0 0.0
        %1030 = vmatprep.subr.mxu0 0.0
        %1031 = vmatpush2.msra.mxu0 0.0
        %1032 = vmatprep.subr.mxu0 0.0
        %1033 = vmatpush2.msra.mxu0 0.0
        %1034 = vmatprep.subr.mxu0 0.0
        %1035 = vmatpush2.msra.mxu0 0.0
        %1036 = vmatprep.subr.mxu0 0.0
        %1037 = vmatpush2.msra.mxu0 0.0
        %1038 = vmatprep.subr.mxu0 0.0
        %1039 = vmatpush2.msra.mxu0 0.0
        %1040 = vmatprep.subr.mxu0 0.0
        %1041 = vmatpush2.msra.mxu0 0.0
        %1042 = vmatprep.subr.mxu0 0.0
        %1043 = vmatpush2.msra.mxu0 0.0
        %1044 = vmatprep.subr.mxu0 0.0
        %1045 = vmatpush2.msra.mxu0 0.0
        %1046 = vmatprep.subr.mxu0 0.0
        %1047 = vmatpush2.msra.mxu0 0.0
        %1048 = vmatprep.subr.mxu0 0.0
        %1049 = vmatpush2.msra.mxu0 0.0
        %1050 = vmatprep.subr.mxu0 0.0
        %1051 = vmatpush2.msra.mxu0 0.0
        %1052 = vmatprep.subr.mxu0 0.0
        %1053 = vmatpush2.msra.mxu0 0.0
        %1054 = vmatprep.subr.mxu0 0.0
        %1055 = vmatpush2.msra.mxu0 0.0
        %1056 = vmatprep.subr.mxu0 0.0
        %1057 = vmatpush2.msra.mxu0 0.0
        %1058 = vmatprep.mubr.f32.mxu0 0.0
        %1059 = vmatmul.mubr.f32.gmra.mxu0 %v465
        %v1060 = vpop.f32.mrf.mxu0
        %v1061 = vadd.f32 %v977, %v1060
        %v1062 = vpop.f32.mrf.mxu0
        %v1063 = vadd.f32 %v981, %v1062
        %1064 = vdwg.mxu0
        %1065 = vmatprep.subr.mxu0 %v972
        %1066 = vmatpush1.msra.mxu0 %v956
        %1067 = vmatprep.subr.mxu0 %v971
        %1068 = vmatpush1.msra.mxu0 %v955
        %1069 = vmatprep.subr.mxu0 %v970
        %1070 = vmatpush1.msra.mxu0 %v954
        %1071 = vmatprep.subr.mxu0 %v969
        %1072 = vmatpush1.msra.mxu0 %v953
        %1073 = vmatprep.subr.mxu0 %v968
        %1074 = vmatpush1.msra.mxu0 %v952
        %1075 = vmatprep.subr.mxu0 %v967
        %1076 = vmatpush1.msra.mxu0 %v951
        %1077 = vmatprep.subr.mxu0 %v966
        %1078 = vmatpush1.msra.mxu0 %v950
        %1079 = vmatprep.subr.mxu0 %v965
        %1080 = vmatpush1.msra.mxu0 %v949
        %1081 = vmatprep.subr.mxu0 %v964
        %1082 = vmatpush1.msra.mxu0 %v948
        %1083 = vmatprep.subr.mxu0 %v963
        %1084 = vmatpush1.msra.mxu0 %v947
        %1085 = vmatprep.subr.mxu0 %v962
        %1086 = vmatpush1.msra.mxu0 %v946
        %1087 = vmatprep.subr.mxu0 %v961
        %1088 = vmatpush1.msra.mxu0 %v945
        %1089 = vmatprep.subr.mxu0 %v960
        %1090 = vmatpush1.msra.mxu0 %v944
        %1091 = vmatprep.subr.mxu0 %v959
        %1092 = vmatpush1.msra.mxu0 %v943
        %1093 = vmatprep.subr.mxu0 %v958
        %1094 = vmatpush1.msra.mxu0 %v942
        %1095 = vmatprep.subr.mxu0 %v957
        %1096 = vmatpush1.msra.mxu0 %v941
        %1097 = vmatprep.subr.mxu0 0.0
        %1098 = vmatpush2.msra.mxu0 0.0
        %1099 = vmatprep.subr.mxu0 0.0
        %1100 = vmatpush2.msra.mxu0 0.0
        %1101 = vmatprep.subr.mxu0 0.0
        %1102 = vmatpush2.msra.mxu0 0.0
        %1103 = vmatprep.subr.mxu0 0.0
        %1104 = vmatpush2.msra.mxu0 0.0
        %1105 = vmatprep.subr.mxu0 0.0
        %1106 = vmatpush2.msra.mxu0 0.0
        %1107 = vmatprep.subr.mxu0 0.0
        %1108 = vmatpush2.msra.mxu0 0.0
        %1109 = vmatprep.subr.mxu0 0.0
        %1110 = vmatpush2.msra.mxu0 0.0
        %1111 = vmatprep.subr.mxu0 0.0
        %1112 = vmatpush2.msra.mxu0 0.0
        %1113 = vmatprep.subr.mxu0 0.0
        %1114 = vmatpush2.msra.mxu0 0.0
        %1115 = vmatprep.subr.mxu0 0.0
        %1116 = vmatpush2.msra.mxu0 0.0
        %1117 = vmatprep.subr.mxu0 0.0
        %1118 = vmatpush2.msra.mxu0 0.0
        %1119 = vmatprep.subr.mxu0 0.0
        %1120 = vmatpush2.msra.mxu0 0.0
        %1121 = vmatprep.subr.mxu0 0.0
        %1122 = vmatpush2.msra.mxu0 0.0
        %1123 = vmatprep.subr.mxu0 0.0
        %1124 = vmatpush2.msra.mxu0 0.0
        %1125 = vmatprep.subr.mxu0 0.0
        %1126 = vmatpush2.msra.mxu0 0.0
        %1127 = vmatprep.subr.mxu0 0.0
        %1128 = vmatpush2.msra.mxu0 0.0
        %1129 = vmatprep.mubr.f32.mxu0 0.0
        %1130 = vmatmul.mubr.f32.gmra.mxu0 %v465
        %v1131 = vpop.f32.mrf.mxu0
        %v1132 = vadd.f32 %v985, %v1131
        %v1133 = vpop.f32.mrf.mxu0
        %v1134 = vadd.f32 %v989, %v1133
        %1135 = vdwg.mxu0
        %v1136 = vsel %vm890, 1, 0
        %vm1137 = vcmp.eq.s32.totalorder %v1136, 1
        %v1138 = vsel %vm1137, -inf, %v1061
        %v1139 = vsel %vm1137, -inf, %v1063
        %v1140 = vsel %vm1137, -inf, %v1132
        %v1141 = vsel %vm1137, -inf, %v1134
        %1142 = vst [vmem:[%s353] sm:$0xff] %v1138
        %1143 = vmax.xlane.f32.xlu0 %v1138
        %v1144 = vpop.xlane.xlu0 %1143
        %v1145 = vrot.slane %v1144, 4
        %v1146 = vmax.f32 %v1144, %v1145
        %v1147 = vrot.slane %v1146, 2
        %v1148 = vmax.f32 %v1146, %v1147
        %v1149 = vrot.slane %v1148, 1
        %v1150 = vmax.f32 %v1148, %v1149
        %s1151 = vtos %v1150
        %v1152 = vstv %s1151
        %v1153 = vsub.f32 %v1138, %v1152
        %v1154 = vmul.f32 %v1153, 1.442695
        %v1155 = vpow.pop %v1154
        %1156 = vadd.xlane.f32.xlu0 %v1155
        %v1157 = vpop.xlane.xlu0 %1156
        %v1158 = vrot.slane %v1157, 4
        %v1159 = vadd.f32 %v1157, %v1158
        %v1160 = vrot.slane %v1159, 2
        %v1161 = vadd.f32 %v1159, %v1160
        %v1162 = vrot.slane %v1161, 1
        %v1163 = vadd.f32 %v1161, %v1162
        %s1164 = vtos %v1163
        %v1165 = vstv %s1164
        %v1166 = vrcp.pop %v1165
        %v1167 = vmul.f32 %v1155, %v1166
        %1168 = vst [vmem:[%s346] sm:$0xff] %v1167
        %s1169 = scalar_lea.vmem %s353, 8 [#allocation4]
        %1170 = vst [vmem:[%s1169] sm:$0xff] %v1139
        %1171 = vmax.xlane.f32.xlu0 %v1139
        %v1172 = vpop.xlane.xlu0 %1171
        %v1173 = vrot.slane %v1172, 4
        %v1174 = vmax.f32 %v1172, %v1173
        %v1175 = vrot.slane %v1174, 2
        %v1176 = vmax.f32 %v1174, %v1175
        %v1177 = vrot.slane %v1176, 1
        %v1178 = vmax.f32 %v1176, %v1177
        %s1179 = vtos %v1178
        %v1180 = vstv %s1179
        %v1181 = vsub.f32 %v1139, %v1180
        %v1182 = vmul.f32 %v1181, 1.442695
        %v1183 = vpow.pop %v1182
        %1184 = vadd.xlane.f32.xlu0 %v1183
        %v1185 = vpop.xlane.xlu0 %1184
        %v1186 = vrot.slane %v1185, 4
        %v1187 = vadd.f32 %v1185, %v1186
        %v1188 = vrot.slane %v1187, 2
        %v1189 = vadd.f32 %v1187, %v1188
        %v1190 = vrot.slane %v1189, 1
        %v1191 = vadd.f32 %v1189, %v1190
        %s1192 = vtos %v1191
        %v1193 = vstv %s1192
        %v1194 = vrcp.pop %v1193
        %v1195 = vmul.f32 %v1183, %v1194
        %s1196 = scalar_lea.vmem %s346, 8 [#allocation2]
        %1197 = vst [vmem:[%s1196] sm:$0xff] %v1195
        %s1198 = scalar_lea.vmem %s353, 16 [#allocation4]
        %1199 = vst [vmem:[%s1198] sm:$0xff] %v1140
        %1200 = vmax.xlane.f32.xlu0 %v1140
        %v1201 = vpop.xlane.xlu0 %1200
        %v1202 = vrot.slane %v1201, 4
        %v1203 = vmax.f32 %v1201, %v1202
        %v1204 = vrot.slane %v1203, 2
        %v1205 = vmax.f32 %v1203, %v1204
        %v1206 = vrot.slane %v1205, 1
        %v1207 = vmax.f32 %v1205, %v1206
        %s1208 = vtos %v1207
        %v1209 = vstv %s1208
        %v1210 = vsub.f32 %v1140, %v1209
        %v1211 = vmul.f32 %v1210, 1.442695
        %v1212 = vpow.pop %v1211
        %1213 = vadd.xlane.f32.xlu0 %v1212
        %v1214 = vpop.xlane.xlu0 %1213
        %v1215 = vrot.slane %v1214, 4
        %v1216 = vadd.f32 %v1214, %v1215
        %v1217 = vrot.slane %v1216, 2
        %v1218 = vadd.f32 %v1216, %v1217
        %v1219 = vrot.slane %v1218, 1
        %v1220 = vadd.f32 %v1218, %v1219
        %s1221 = vtos %v1220
        %v1222 = vstv %s1221
        %v1223 = vrcp.pop %v1222
        %v1224 = vmul.f32 %v1212, %v1223
        %s1225 = scalar_lea.vmem %s346, 16 [#allocation2]
        %1226 = vst [vmem:[%s1225] sm:$0xff] %v1224
        %s1227 = scalar_lea.vmem %s353, 24 [#allocation4]
        %1228 = vst [vmem:[%s1227] sm:$0xff] %v1141
        %1229 = vmax.xlane.f32.xlu0 %v1141
        %v1230 = vpop.xlane.xlu0 %1229
        %v1231 = vrot.slane %v1230, 4
        %v1232 = vmax.f32 %v1230, %v1231
        %v1233 = vrot.slane %v1232, 2
        %v1234 = vmax.f32 %v1232, %v1233
        %v1235 = vrot.slane %v1234, 1
        %v1236 = vmax.f32 %v1234, %v1235
        %s1237 = vtos %v1236
        %v1238 = vstv %s1237
        %v1239 = vsub.f32 %v1141, %v1238
        %v1240 = vmul.f32 %v1239, 1.442695
        %v1241 = vpow.pop %v1240
        %1242 = vadd.xlane.f32.xlu0 %v1241
        %v1243 = vpop.xlane.xlu0 %1242
        %v1244 = vrot.slane %v1243, 4
        %v1245 = vadd.f32 %v1243, %v1244
        %v1246 = vrot.slane %v1245, 2
        %v1247 = vadd.f32 %v1245, %v1246
        %v1248 = vrot.slane %v1247, 1
        %v1249 = vadd.f32 %v1247, %v1248
        %s1250 = vtos %v1249
        %v1251 = vstv %s1250
        %v1252 = vrcp.pop %v1251
        %v1253 = vmul.f32 %v1241, %v1252
        %s1254 = scalar_lea.vmem %s346, 24 [#allocation2]
        %1255 = vst [vmem:[%s1254] sm:$0xff] %v1253
        %1272 = vrot.lane.b32.xlu0 %v577, 120
        %v1273 = vpop.permute.xlu0 %1272
        %1274 = vrot.lane.b32.xlu0 %v578, 120
        %v1275 = vpop.permute.xlu0 %1274
        %1276 = vrot.lane.b32.xlu0 %v579, 120
        %v1277 = vpop.permute.xlu0 %1276
        %1278 = vrot.lane.b32.xlu0 %v580, 120
        %v1279 = vpop.permute.xlu0 %1278
        %1280 = vrot.lane.b32.xlu0 %v581, 120
        %v1281 = vpop.permute.xlu0 %1280
        %1282 = vrot.lane.b32.xlu0 %v582, 120
        %v1283 = vpop.permute.xlu0 %1282
        %1284 = vrot.lane.b32.xlu0 %v583, 120
        %v1285 = vpop.permute.xlu0 %1284
        %1286 = vrot.lane.b32.xlu0 %v584, 120
        %v1287 = vpop.permute.xlu0 %1286
        %1288 = vrot.lane.b32.xlu0 %v585, 120
        %v1289 = vpop.permute.xlu0 %1288
        %1290 = vrot.lane.b32.xlu0 %v586, 120
        %v1291 = vpop.permute.xlu0 %1290
        %1292 = vrot.lane.b32.xlu0 %v587, 120
        %v1293 = vpop.permute.xlu0 %1292
        %1294 = vrot.lane.b32.xlu0 %v588, 120
        %v1295 = vpop.permute.xlu0 %1294
        %1296 = vrot.lane.b32.xlu0 %v589, 120
        %v1297 = vpop.permute.xlu0 %1296
        %1298 = vrot.lane.b32.xlu0 %v590, 120
        %v1299 = vpop.permute.xlu0 %1298
        %1300 = vrot.lane.b32.xlu0 %v591, 120
        %v1301 = vpop.permute.xlu0 %1300
        %1302 = vrot.lane.b32.xlu0 %v592, 120
        %v1303 = vpop.permute.xlu0 %1302
        %v1320 = vsel %vm892, %v1273, 0.0
        %v1321 = vsel %vm892, %v1275, 0.0
        %v1322 = vsel %vm892, %v1277, 0.0
        %v1323 = vsel %vm892, %v1279, 0.0
        %v1324 = vsel %vm892, %v1281, 0.0
        %v1325 = vsel %vm892, %v1283, 0.0
        %v1326 = vsel %vm892, %v1285, 0.0
        %v1327 = vsel %vm892, %v1287, 0.0
        %v1328 = vsel %vm892, %v1289, 0.0
        %v1329 = vsel %vm892, %v1291, 0.0
        %v1330 = vsel %vm892, %v1293, 0.0
        %v1331 = vsel %vm892, %v1295, 0.0
        %v1332 = vsel %vm892, %v1297, 0.0
        %v1333 = vsel %vm892, %v1299, 0.0
        %v1334 = vsel %vm892, %v1301, 0.0
        %v1335 = vsel %vm892, %v1303, 0.0
        %v1336 = vmul.f32 %v1320, %v612
        %v1337 = vmul.f32 %v1321, %v617
        %v1338 = vmul.f32 %v1322, %v622
        %v1339 = vmul.f32 %v1323, %v627
        %v1340 = vmul.f32 %v1324, %v632
        %v1341 = vmul.f32 %v1325, %v637
        %v1342 = vmul.f32 %v1326, %v642
        %v1343 = vmul.f32 %v1327, %v647
        %v1344 = vmul.f32 %v1328, %v652
        %v1345 = vmul.f32 %v1329, %v657
        %v1346 = vmul.f32 %v1330, %v662
        %v1347 = vmul.f32 %v1331, %v667
        %v1348 = vmul.f32 %v1332, %v672
        %v1349 = vmul.f32 %v1333, %v677
        %v1350 = vmul.f32 %v1334, %v682
        %v1351 = vmul.f32 %v1335, %v687
        %v1352 = vmul.f32 %v1320, %v691
        %v1353 = vmul.f32 %v1321, %v695
        %v1354 = vmul.f32 %v1322, %v699
        %v1355 = vmul.f32 %v1323, %v703
        %v1356 = vmul.f32 %v1324, %v707
        %v1357 = vmul.f32 %v1325, %v711
        %v1358 = vmul.f32 %v1326, %v715
        %v1359 = vmul.f32 %v1327, %v719
        %v1360 = vmul.f32 %v1328, %v723
        %v1361 = vmul.f32 %v1329, %v727
        %v1362 = vmul.f32 %v1330, %v731
        %v1363 = vmul.f32 %v1331, %v735
        %v1364 = vmul.f32 %v1332, %v739
        %v1365 = vmul.f32 %v1333, %v743
        %v1366 = vmul.f32 %v1334, %v747
        %v1367 = vmul.f32 %v1335, %v751
        %v1368 = vmul.f32 %v1320, %v755
        %v1369 = vmul.f32 %v1321, %v759
        %v1370 = vmul.f32 %v1322, %v763
        %v1371 = vmul.f32 %v1323, %v767
        %v1372 = vmul.f32 %v1324, %v771
        %v1373 = vmul.f32 %v1325, %v775
        %v1374 = vmul.f32 %v1326, %v779
        %v1375 = vmul.f32 %v1327, %v783
        %v1376 = vmul.f32 %v1328, %v787
        %v1377 = vmul.f32 %v1329, %v791
        %v1378 = vmul.f32 %v1330, %v795
        %v1379 = vmul.f32 %v1331, %v799
        %v1380 = vmul.f32 %v1332, %v803
        %v1381 = vmul.f32 %v1333, %v807
        %v1382 = vmul.f32 %v1334, %v811
        %v1383 = vmul.f32 %v1335, %v815
        %v1384 = vmul.f32 %v1320, %v819
        %v1385 = vmul.f32 %v1321, %v823
        %v1386 = vmul.f32 %v1322, %v827
        %v1387 = vmul.f32 %v1323, %v831
        %v1388 = vmul.f32 %v1324, %v835
        %v1389 = vmul.f32 %v1325, %v839
        %v1390 = vmul.f32 %v1326, %v843
        %v1391 = vmul.f32 %v1327, %v847
        %v1392 = vmul.f32 %v1328, %v851
        %v1393 = vmul.f32 %v1329, %v855
        %v1394 = vmul.f32 %v1330, %v859
        %v1395 = vmul.f32 %v1331, %v863
        %v1396 = vmul.f32 %v1332, %v867
        %v1397 = vmul.f32 %v1333, %v871
        %v1398 = vmul.f32 %v1334, %v875
        %v1399 = vmul.f32 %v1335, %v879
        %1400 = vmatprep.subr.mxu0 %v1367
        %1401 = vmatpush1.msra.mxu0 %v1351
        %1402 = vmatprep.subr.mxu0 %v1366
        %1403 = vmatpush1.msra.mxu0 %v1350
        %1404 = vmatprep.subr.mxu0 %v1365
        %1405 = vmatpush1.msra.mxu0 %v1349
        %1406 = vmatprep.subr.mxu0 %v1364
        %1407 = vmatpush1.msra.mxu0 %v1348
        %1408 = vmatprep.subr.mxu0 %v1363
        %1409 = vmatpush1.msra.mxu0 %v1347
        %1410 = vmatprep.subr.mxu0 %v1362
        %1411 = vmatpush1.msra.mxu0 %v1346
        %1412 = vmatprep.subr.mxu0 %v1361
        %1413 = vmatpush1.msra.mxu0 %v1345
        %1414 = vmatprep.subr.mxu0 %v1360
        %1415 = vmatpush1.msra.mxu0 %v1344
        %1416 = vmatprep.subr.mxu0 %v1359
        %1417 = vmatpush1.msra.mxu0 %v1343
        %1418 = vmatprep.subr.mxu0 %v1358
        %1419 = vmatpush1.msra.mxu0 %v1342
        %1420 = vmatprep.subr.mxu0 %v1357
        %1421 = vmatpush1.msra.mxu0 %v1341
        %1422 = vmatprep.subr.mxu0 %v1356
        %1423 = vmatpush1.msra.mxu0 %v1340
        %1424 = vmatprep.subr.mxu0 %v1355
        %1425 = vmatpush1.msra.mxu0 %v1339
        %1426 = vmatprep.subr.mxu0 %v1354
        %1427 = vmatpush1.msra.mxu0 %v1338
        %1428 = vmatprep.subr.mxu0 %v1353
        %1429 = vmatpush1.msra.mxu0 %v1337
        %1430 = vmatprep.subr.mxu0 %v1352
        %1431 = vmatpush1.msra.mxu0 %v1336
        %1432 = vmatprep.subr.mxu0 0.0
        %1433 = vmatpush2.msra.mxu0 0.0
        %1434 = vmatprep.subr.mxu0 0.0
        %1435 = vmatpush2.msra.mxu0 0.0
        %1436 = vmatprep.subr.mxu0 0.0
        %1437 = vmatpush2.msra.mxu0 0.0
        %1438 = vmatprep.subr.mxu0 0.0
        %1439 = vmatpush2.msra.mxu0 0.0
        %1440 = vmatprep.subr.mxu0 0.0
        %1441 = vmatpush2.msra.mxu0 0.0
        %1442 = vmatprep.subr.mxu0 0.0
        %1443 = vmatpush2.msra.mxu0 0.0
        %1444 = vmatprep.subr.mxu0 0.0
        %1445 = vmatpush2.msra.mxu0 0.0
        %1446 = vmatprep.subr.mxu0 0.0
        %1447 = vmatpush2.msra.mxu0 0.0
        %1448 = vmatprep.subr.mxu0 0.0
        %1449 = vmatpush2.msra.mxu0 0.0
        %1450 = vmatprep.subr.mxu0 0.0
        %1451 = vmatpush2.msra.mxu0 0.0
        %1452 = vmatprep.subr.mxu0 0.0
        %1453 = vmatpush2.msra.mxu0 0.0
        %1454 = vmatprep.subr.mxu0 0.0
        %1455 = vmatpush2.msra.mxu0 0.0
        %1456 = vmatprep.subr.mxu0 0.0
        %1457 = vmatpush2.msra.mxu0 0.0
        %1458 = vmatprep.subr.mxu0 0.0
        %1459 = vmatpush2.msra.mxu0 0.0
        %1460 = vmatprep.subr.mxu0 0.0
        %1461 = vmatpush2.msra.mxu0 0.0
        %1462 = vmatprep.subr.mxu0 0.0
        %1463 = vmatpush2.msra.mxu0 0.0
        %1464 = vmatprep.mubr.f32.mxu0 0.0
        %1465 = vmatmul.mubr.f32.gmra.mxu0 %v466
        %v1466 = vpop.f32.mrf.mxu0
        %v1467 = vadd.f32 %v977, %v1466
        %v1468 = vpop.f32.mrf.mxu0
        %v1469 = vadd.f32 %v981, %v1468
        %1470 = vdwg.mxu0
        %1471 = vmatprep.subr.mxu0 %v1399
        %1472 = vmatpush1.msra.mxu0 %v1383
        %1473 = vmatprep.subr.mxu0 %v1398
        %1474 = vmatpush1.msra.mxu0 %v1382
        %1475 = vmatprep.subr.mxu0 %v1397
        %1476 = vmatpush1.msra.mxu0 %v1381
        %1477 = vmatprep.subr.mxu0 %v1396
        %1478 = vmatpush1.msra.mxu0 %v1380
        %1479 = vmatprep.subr.mxu0 %v1395
        %1480 = vmatpush1.msra.mxu0 %v1379
        %1481 = vmatprep.subr.mxu0 %v1394
        %1482 = vmatpush1.msra.mxu0 %v1378
        %1483 = vmatprep.subr.mxu0 %v1393
        %1484 = vmatpush1.msra.mxu0 %v1377
        %1485 = vmatprep.subr.mxu0 %v1392
        %1486 = vmatpush1.msra.mxu0 %v1376
        %1487 = vmatprep.subr.mxu0 %v1391
        %1488 = vmatpush1.msra.mxu0 %v1375
        %1489 = vmatprep.subr.mxu0 %v1390
        %1490 = vmatpush1.msra.mxu0 %v1374
        %1491 = vmatprep.subr.mxu0 %v1389
        %1492 = vmatpush1.msra.mxu0 %v1373
        %1493 = vmatprep.subr.mxu0 %v1388
        %1494 = vmatpush1.msra.mxu0 %v1372
        %1495 = vmatprep.subr.mxu0 %v1387
        %1496 = vmatpush1.msra.mxu0 %v1371
        %1497 = vmatprep.subr.mxu0 %v1386
        %1498 = vmatpush1.msra.mxu0 %v1370
        %1499 = vmatprep.subr.mxu0 %v1385
        %1500 = vmatpush1.msra.mxu0 %v1369
        %1501 = vmatprep.subr.mxu0 %v1384
        %1502 = vmatpush1.msra.mxu0 %v1368
        %1503 = vmatprep.subr.mxu0 0.0
        %1504 = vmatpush2.msra.mxu0 0.0
        %1505 = vmatprep.subr.mxu0 0.0
        %1506 = vmatpush2.msra.mxu0 0.0
        %1507 = vmatprep.subr.mxu0 0.0
        %1508 = vmatpush2.msra.mxu0 0.0
        %1509 = vmatprep.subr.mxu0 0.0
        %1510 = vmatpush2.msra.mxu0 0.0
        %1511 = vmatprep.subr.mxu0 0.0
        %1512 = vmatpush2.msra.mxu0 0.0
        %1513 = vmatprep.subr.mxu0 0.0
        %1514 = vmatpush2.msra.mxu0 0.0
        %1515 = vmatprep.subr.mxu0 0.0
        %1516 = vmatpush2.msra.mxu0 0.0
        %1517 = vmatprep.subr.mxu0 0.0
        %1518 = vmatpush2.msra.mxu0 0.0
        %1519 = vmatprep.subr.mxu0 0.0
        %1520 = vmatpush2.msra.mxu0 0.0
        %1521 = vmatprep.subr.mxu0 0.0
        %1522 = vmatpush2.msra.mxu0 0.0
        %1523 = vmatprep.subr.mxu0 0.0
        %1524 = vmatpush2.msra.mxu0 0.0
        %1525 = vmatprep.subr.mxu0 0.0
        %1526 = vmatpush2.msra.mxu0 0.0
        %1527 = vmatprep.subr.mxu0 0.0
        %1528 = vmatpush2.msra.mxu0 0.0
        %1529 = vmatprep.subr.mxu0 0.0
        %1530 = vmatpush2.msra.mxu0 0.0
        %1531 = vmatprep.subr.mxu0 0.0
        %1532 = vmatpush2.msra.mxu0 0.0
        %1533 = vmatprep.subr.mxu0 0.0
        %1534 = vmatpush2.msra.mxu0 0.0
        %1535 = vmatprep.mubr.f32.mxu0 0.0
        %1536 = vmatmul.mubr.f32.gmra.mxu0 %v466
        %v1537 = vpop.f32.mrf.mxu0
        %v1538 = vadd.f32 %v985, %v1537
        %v1539 = vpop.f32.mrf.mxu0
        %v1540 = vadd.f32 %v989, %v1539
        %1541 = vdwg.mxu0
        %v1542 = vsel %vm891, 1, 0
        %vm1543 = vcmp.eq.s32.totalorder %v1542, 1
        %v1544 = vsel %vm1543, -inf, %v1467
        %v1545 = vsel %vm1543, -inf, %v1469
        %v1546 = vsel %vm1543, -inf, %v1538
        %v1547 = vsel %vm1543, -inf, %v1540
        %s1548 = scalar_lea.vmem %s353, 32 [#allocation4]
        %1549 = vst [vmem:[%s1548] sm:$0xff] %v1544
        %1550 = vmax.xlane.f32.xlu0 %v1544
        %v1551 = vpop.xlane.xlu0 %1550
        %v1552 = vrot.slane %v1551, 4
        %v1553 = vmax.f32 %v1551, %v1552
        %v1554 = vrot.slane %v1553, 2
        %v1555 = vmax.f32 %v1553, %v1554
        %v1556 = vrot.slane %v1555, 1
        %v1557 = vmax.f32 %v1555, %v1556
        %s1558 = vtos %v1557
        %v1559 = vstv %s1558
        %v1560 = vsub.f32 %v1544, %v1559
        %v1561 = vmul.f32 %v1560, 1.442695
        %v1562 = vpow.pop %v1561
        %1563 = vadd.xlane.f32.xlu0 %v1562
        %v1564 = vpop.xlane.xlu0 %1563
        %v1565 = vrot.slane %v1564, 4
        %v1566 = vadd.f32 %v1564, %v1565
        %v1567 = vrot.slane %v1566, 2
        %v1568 = vadd.f32 %v1566, %v1567
        %v1569 = vrot.slane %v1568, 1
        %v1570 = vadd.f32 %v1568, %v1569
        %s1571 = vtos %v1570
        %v1572 = vstv %s1571
        %v1573 = vrcp.pop %v1572
        %v1574 = vmul.f32 %v1562, %v1573
        %s1575 = scalar_lea.vmem %s346, 32 [#allocation2]
        %1576 = vst [vmem:[%s1575] sm:$0xff] %v1574
        %s1577 = scalar_lea.vmem %s353, 40 [#allocation4]
        %1578 = vst [vmem:[%s1577] sm:$0xff] %v1545
        %1579 = vmax.xlane.f32.xlu0 %v1545
        %v1580 = vpop.xlane.xlu0 %1579
        %v1581 = vrot.slane %v1580, 4
        %v1582 = vmax.f32 %v1580, %v1581
        %v1583 = vrot.slane %v1582, 2
        %v1584 = vmax.f32 %v1582, %v1583
        %v1585 = vrot.slane %v1584, 1
        %v1586 = vmax.f32 %v1584, %v1585
        %s1587 = vtos %v1586
        %v1588 = vstv %s1587
        %v1589 = vsub.f32 %v1545, %v1588
        %v1590 = vmul.f32 %v1589, 1.442695
        %v1591 = vpow.pop %v1590
        %1592 = vadd.xlane.f32.xlu0 %v1591
        %v1593 = vpop.xlane.xlu0 %1592
        %v1594 = vrot.slane %v1593, 4
        %v1595 = vadd.f32 %v1593, %v1594
        %v1596 = vrot.slane %v1595, 2
        %v1597 = vadd.f32 %v1595, %v1596
        %v1598 = vrot.slane %v1597, 1
        %v1599 = vadd.f32 %v1597, %v1598
        %s1600 = vtos %v1599
        %v1601 = vstv %s1600
        %v1602 = vrcp.pop %v1601
        %v1603 = vmul.f32 %v1591, %v1602
        %s1604 = scalar_lea.vmem %s346, 40 [#allocation2]
        %1605 = vst [vmem:[%s1604] sm:$0xff] %v1603
        %s1606 = scalar_lea.vmem %s353, 48 [#allocation4]
        %1607 = vst [vmem:[%s1606] sm:$0xff] %v1546
        %1608 = vmax.xlane.f32.xlu0 %v1546
        %v1609 = vpop.xlane.xlu0 %1608
        %v1610 = vrot.slane %v1609, 4
        %v1611 = vmax.f32 %v1609, %v1610
        %v1612 = vrot.slane %v1611, 2
        %v1613 = vmax.f32 %v1611, %v1612
        %v1614 = vrot.slane %v1613, 1
        %v1615 = vmax.f32 %v1613, %v1614
        %s1616 = vtos %v1615
        %v1617 = vstv %s1616
        %v1618 = vsub.f32 %v1546, %v1617
        %v1619 = vmul.f32 %v1618, 1.442695
        %v1620 = vpow.pop %v1619
        %1621 = vadd.xlane.f32.xlu0 %v1620
        %v1622 = vpop.xlane.xlu0 %1621
        %v1623 = vrot.slane %v1622, 4
        %v1624 = vadd.f32 %v1622, %v1623
        %v1625 = vrot.slane %v1624, 2
        %v1626 = vadd.f32 %v1624, %v1625
        %v1627 = vrot.slane %v1626, 1
        %v1628 = vadd.f32 %v1626, %v1627
        %s1629 = vtos %v1628
        %v1630 = vstv %s1629
        %v1631 = vrcp.pop %v1630
        %v1632 = vmul.f32 %v1620, %v1631
        %s1633 = scalar_lea.vmem %s346, 48 [#allocation2]
        %1634 = vst [vmem:[%s1633] sm:$0xff] %v1632
        %s1635 = scalar_lea.vmem %s353, 56 [#allocation4]
        %1636 = vst [vmem:[%s1635] sm:$0xff] %v1547
        %1637 = vmax.xlane.f32.xlu0 %v1547
        %v1638 = vpop.xlane.xlu0 %1637
        %v1639 = vrot.slane %v1638, 4
        %v1640 = vmax.f32 %v1638, %v1639
        %v1641 = vrot.slane %v1640, 2
        %v1642 = vmax.f32 %v1640, %v1641
        %v1643 = vrot.slane %v1642, 1
        %v1644 = vmax.f32 %v1642, %v1643
        %s1645 = vtos %v1644
        %v1646 = vstv %s1645
        %v1647 = vsub.f32 %v1547, %v1646
        %v1648 = vmul.f32 %v1647, 1.442695
        %v1649 = vpow.pop %v1648
        %1650 = vadd.xlane.f32.xlu0 %v1649
        %v1651 = vpop.xlane.xlu0 %1650
        %v1652 = vrot.slane %v1651, 4
        %v1653 = vadd.f32 %v1651, %v1652
        %v1654 = vrot.slane %v1653, 2
        %v1655 = vadd.f32 %v1653, %v1654
        %v1656 = vrot.slane %v1655, 1
        %v1657 = vadd.f32 %v1655, %v1656
        %s1658 = vtos %v1657
        %v1659 = vstv %s1658
        %v1660 = vrcp.pop %v1659
        %v1661 = vmul.f32 %v1649, %v1660
        %s1662 = scalar_lea.vmem %s346, 56 [#allocation2]
        %1663 = vst [vmem:[%s1662] sm:$0xff] %v1661
        %s1664 = sand.u32 %s213, 1
        %s1665 = scalar_lea.sflag [#allocation3], %s1664
        %s1666 = sand.u32 %s213, 1
        %s1667 = smul.addr %s1666, 64
        %s1668 = scalar_lea.vmem [#allocation2], %s1667
        %s1669 = sand.u32 %s239, 1
        %s1670 = scalar_lea.sflag [#allocation5], %s1669
        %s1671 = sand.u32 %s239, 1
        %s1672 = smul.addr %s1671, 64
        %s1673 = scalar_lea.vmem [#allocation4], %s1672
        // Predicated region
        $region53: #{tpu_custom_call.1} parent=51 // pred_check
          %p1674 = pneg %p223
        $region54: #{tpu_custom_call.1} parent=51 // pred_check_branch
          %1676 = sbr.rel (%p1674) target = $region56
        $region55: #{tpu_custom_call.1} parent=51 // pred_region
          %s1677 = smul.u32 2, %s27
          %s1679 = ssub.s32 1024, 1024
          %1680 = vsyncadd %s1665, %s1679
          %s1681 = smul.addr %s1677, 4
          %s1682 = smul.addr %s1681, 128
          %s1683 = scalar_lea.hbm %s8, %s1682
          %s1684 = sshll.u32 %s1668, 4
          %s1685 = int_to_ptr.vmem [resolvable:$true] %s1684
          %1690 = dma.vmem_to_hbm [thread:$0]  %s1685, 1024, %s1683, %s1665, 128, 128, 8
        $region56: #{tpu_custom_call.1} parent=51 // pred_fallthru
          _
        // Predicated region
        $region57: #{tpu_custom_call.1} parent=51 // pred_check
          %p1691 = pneg %p249
        $region58: #{tpu_custom_call.1} parent=51 // pred_check_branch
          %1693 = sbr.rel (%p1691) target = $region60
        $region59: #{tpu_custom_call.1} parent=51 // pred_region
          %s1694 = smul.u32 2, %s27
          %s1696 = ssub.s32 1024, 1024
          %1697 = vsyncadd %s1670, %s1696
          %s1698 = smul.addr %s1694, 4
          %s1699 = smul.addr %s1698, 128
          %s1700 = scalar_lea.hbm %s9, %s1699
          %s1701 = sshll.u32 %s1673, 4
          %s1702 = int_to_ptr.vmem [resolvable:$true] %s1701
          %1707 = dma.vmem_to_hbm [thread:$0]  %s1702, 1024, %s1700, %s1670, 128, 128, 8
        $region60: #{tpu_custom_call.1} parent=51 // pred_fallthru
          _
      $region52: #{tpu_custom_call.1} parent=5 // pred_fallthru
        _
      %p1708 = scmp.le.s32.totalorder 2, %s22
      // Predicated region
      $region61: #{tpu_custom_call.1} parent=5 // pred_check
        %p1709 = pneg %p1708
      $region62: #{tpu_custom_call.1} parent=5 // pred_check_branch
        %1711 = sbr.rel (%p1709) target = $region64
      $region63: #{tpu_custom_call.1} parent=5 // pred_region
        %s1712 = ssub.s32 %s22, 2
        // Predicated region
        $region65: #{tpu_custom_call.1} parent=63 // pred_check
          %p1713 = pneg %p229
        $region66: #{tpu_custom_call.1} parent=63 // pred_check_branch
          %1715 = sbr.rel (%p1713) target = $region68
        $region67: #{tpu_custom_call.1} parent=63 // pred_region
          %s1716 = sand.u32 %s214, 1
          %s1717 = scalar_lea.sflag [#allocation3], %s1716
          %s1718 = sand.u32 %s214, 1
          %s1719 = smul.addr %s1718, 64
          %s1720 = scalar_lea.vmem [#allocation2], %s1719
          %1721 = dma.done %s1717, 1024
        $region68: #{tpu_custom_call.1} parent=63 // pred_fallthru
          _
        // Predicated region
        $region69: #{tpu_custom_call.1} parent=63 // pred_check
          %p1722 = pneg %p255
        $region70: #{tpu_custom_call.1} parent=63 // pred_check_branch
          %1724 = sbr.rel (%p1722) target = $region72
        $region71: #{tpu_custom_call.1} parent=63 // pred_region
          %s1725 = sand.u32 %s240, 1
          %s1726 = scalar_lea.sflag [#allocation5], %s1725
          %s1727 = sand.u32 %s240, 1
          %s1728 = smul.addr %s1727, 64
          %s1729 = scalar_lea.vmem [#allocation4], %s1728
          %1730 = dma.done %s1726, 1024
        $region72: #{tpu_custom_call.1} parent=63 // pred_fallthru
          _
      $region64: #{tpu_custom_call.1} parent=5 // pred_fallthru
        _
    $region6: #{tpu_custom_call.1} parent=1 // loop_footer
      %s26 = sadd.s32 1, %s22
    $region7: #{tpu_custom_call.1} parent=1 // loop_footer_branch
      %21 = sbr.rel target = $region3
    $region8: #{tpu_custom_call.1} parent=1 // loop_exit
      _
    %1731 = vsyncpa [#allocation3], 1
    %s1732 = scalar_lea.sflag [#allocation3], 1
    %1733 = vsyncpa %s1732, 1
    %1734 = vsyncpa [#allocation5], 1
    %s1735 = scalar_lea.sflag [#allocation5], 1
    %1736 = vsyncpa %s1735, 1

</llo_original>
